<compile_context>
chip_gen: v6e
topology: v6e:2x2x1
jax: 0.10.0
libtpu: 0.0.40
codegen_flags: <defaults>
</compile_context>

<pallas_src>
import jax
import jax.numpy as jnp
from jax.experimental import pallas as pl
from jax.experimental.pallas import tpu as pltpu


OUT_LANES = 128  # lane-dense padded output width (real output width is 2)


def _round_up(x, m):
    return ((x + m - 1) // m) * m


def _vmem_capacity_bytes():
    try:
        return int(pltpu.get_tpu_info().vmem_capacity_bytes)
    except Exception:
        return 64 << 20  # conservative (v7x per-TC) fallback


def segment_head_kernel(x_ref, w1_ref, b1_ref, w2_ref, b2_ref, o_ref):
    """One grid step processes `tm` (N*T) rows.

    x_ref : (tm, J*C)        flattened representations tile (bf16 or f32)
    w1_ref: (J*C, H)  bf16   first linear weight, tiled over joints and /J
                             (folds the joint-mean into the matmul K axis)
    b1_ref: (1, H)    f32
    w2_ref: (H, 128)  bf16   second linear weight, zero-padded to 128 lanes
    b2_ref: (1, 128)  f32
    o_ref : (tm, 128) bf16   lane-dense output block; wrapper slices [:, :2]
    """
    x = x_ref[...].astype(jnp.bfloat16)          # no-op when stream is bf16
    h = jnp.dot(x, w1_ref[...],
                preferred_element_type=jnp.float32) + b1_ref[...]
    h = jnp.maximum(h, 0.0)                      # ReLU (f32)
    out = jnp.dot(h.astype(jnp.bfloat16), w2_ref[...],
                  preferred_element_type=jnp.float32) + b2_ref[...]
    o_ref[...] = out.astype(o_ref.dtype)


def prepare_segment_head_params(w1, b1, w2, b2, num_joints):
    """Build kernel-ready (bf16) weights once. w1:(C,H) b1:(H,) w2:(H,2) b2:(2,)."""
    J = num_joints
    H = w1.shape[1]
    # Fold the joint-mean into the first matmul: tile over joints and /J (f32
    # math, single bf16 rounding at the end).
    w1_tiled = (jnp.tile(w1.astype(jnp.float32), (J, 1))
                / jnp.float32(J)).astype(jnp.bfloat16)            # (J*C, H)
    b1_2d = b1.reshape(1, H).astype(jnp.float32)
    # Lane-dense output: pad the 2-wide head to 128 lanes with zeros.
    w2_pad = jnp.zeros((H, OUT_LANES), jnp.bfloat16).at[:, :2].set(
        w2.astype(jnp.bfloat16))
    b2_pad = jnp.zeros((1, OUT_LANES), jnp.float32).at[:, :2].set(
        b2.reshape(1, 2).astype(jnp.float32))
    return w1_tiled, b1_2d, w2_pad, b2_pad


def segment_head_pallas(reps, w1_tiled, b1_2d, w2_pad, b2_pad, *, tm=None):
    """reps: (N, T, J, C) -> (N, T, 2), matching SegmentHead.forward."""
    N, T, J, C = reps.shape
    M = N * T
    K = J * C
    H = b1_2d.shape[1]
    x2 = reps.reshape(M, K)
    in_bytes_per_elem = 2 if x2.dtype == jnp.bfloat16 else 4

    # Generation-aware row tile / VMEM budget.
    vmem_cap = _vmem_capacity_bytes()
    if vmem_cap >= (100 << 20):          # v5e / v6e: 128 MiB VMEM
        tm_default, hard_cap = 4096, 96 << 20
    else:                                # v7x: 64 MiB per TensorCore
        tm_default, hard_cap = 2048, 56 << 20
    if tm is None:
        tm = tm_default
    # Keep >= 2 grid steps when possible so "parallel" spans both v7x cores.
    if M > 8:
        tm = min(tm, _round_up(pl.cdiv(M, 2), 8))
    tm = max(8, min(_round_up(tm, 8), _round_up(M, 8)))

    # VMEM limit derived from the tile (double-buffered) with slack.
    x_bytes = tm * K * in_bytes_per_elem
    out_bytes = tm * OUT_LANES * 2
    w_bytes = (K * H + H * OUT_LANES) * 2 + (H + OUT_LANES) * 4
    vmem_limit = max(32 << 20,
                     min(2 * (x_bytes + out_bytes + w_bytes) + (4 << 20),
                         hard_cap))

    grid = (pl.cdiv(M, tm),)   # no wrapper-side pad; tail block is clamped
    out = pl.pallas_call(
        segment_head_kernel,
        out_shape=jax.ShapeDtypeStruct((M, OUT_LANES), jnp.bfloat16),
        grid_spec=pltpu.PrefetchScalarGridSpec(
            num_scalar_prefetch=0,
            grid=grid,
            in_specs=[
                pl.BlockSpec((tm, K), lambda i: (i, 0)),
                pl.BlockSpec((K, H), lambda i: (0, 0)),
                pl.BlockSpec((1, H), lambda i: (0, 0)),
                pl.BlockSpec((H, OUT_LANES), lambda i: (0, 0)),
                pl.BlockSpec((1, OUT_LANES), lambda i: (0, 0)),
            ],
            out_specs=pl.BlockSpec((tm, OUT_LANES), lambda i: (i, 0)),
        ),
        compiler_params=pltpu.CompilerParams(
            dimension_semantics=("parallel",),
            vmem_limit_bytes=int(vmem_limit),
        ),
    )(x2, w1_tiled, b1_2d, w2_pad, b2_pad)

    return out[:, :2].astype(jnp.float32).reshape(N, T, 2)


class ObjectNetPallas:
    """JAX/Pallas re-implementation of ObjectNet's forward pass."""

    def __init__(self, dim_rep=64, hidden_dim=32, num_joints=46, key=None):
        self.dim_rep = dim_rep
        self.hidden_dim = hidden_dim
        self.feat_J = num_joints
        if key is None:
            key = jax.random.PRNGKey(0)
        k1, k2, k3, k4 = jax.random.split(key, 4)
        # nn.Linear(in, out): weight (out, in), bias (out).  Stored transposed
        # (in, out) for the kernel; math identical.
        s1 = 1.0 / jnp.sqrt(dim_rep)
        s2 = 1.0 / jnp.sqrt(hidden_dim)
        self.w1 = jax.random.uniform(k1, (dim_rep, hidden_dim),
                                     jnp.float32, -s1, s1)
        self.b1 = jax.random.uniform(k2, (hidden_dim,), jnp.float32, -s1, s1)
        self.w2 = jax.random.uniform(k3, (hidden_dim, 2),
                                     jnp.float32, -s2, s2)
        self.b2 = jax.random.uniform(k4, (2,), jnp.float32, -s2, s2)
        # Kernel-ready weights built once (bf16 MXU operands, mean-fold, pad).
        (self.w1_tiled, self.b1_2d,
         self.w2_pad, self.b2_pad) = prepare_segment_head_params(
            self.w1, self.b1, self.w2, self.b2, num_joints)

    def backbone(self, x, **kwargs):
        # TODO(synk): real backbone is supplied externally; identity here.
        # Contract: backbone emits bf16 representations so the head's HBM
        # stream is half-width (do not re-cast in the wrapper).
        return {"representations": x.astype(jnp.bfloat16)}

    def __call__(self, x, **kwargs):
        outputs = self.backbone(x, return_rep=True, return_pred=True, **kwargs)
        reps = outputs["representations"]           # (N, T, J, dim_rep) bf16
        return segment_head_pallas(reps, self.w1_tiled, self.b1_2d,
                                   self.w2_pad, self.b2_pad)


def segment_head_ref(reps, w1, b1, w2, b2):
    pooled = jnp.mean(reps.astype(jnp.float32), axis=2)
    h = jnp.maximum(pooled @ w1 + b1, 0.0)
    return h @ w2 + b2


if __name__ == "__main__":
    key = jax.random.PRNGKey(0)
    kx, kp = jax.random.split(key)

    N, T, J, C = 2, 8, 46, 64      # small shapes; J=46 matches num_joints
    x = jax.random.normal(kx, (N, T, J, C), jnp.float32)

    model = ObjectNetPallas(dim_rep=C, hidden_dim=32, num_joints=J, key=kp)

    out = model(x)
    out = jax.block_until_ready(out)

    # Reference on the same bf16 representations the backbone emits, f32 math.
    ref = segment_head_ref(x.astype(jnp.bfloat16),
                           model.w1, model.b1, model.w2, model.b2)
    assert out.shape == (N, T, 2), out.shape
    max_err = float(jnp.max(jnp.abs(out - ref)))
    # bf16 operands + fold-order change -> slightly widened tolerance.
    assert jnp.allclose(out, ref, atol=2e-2, rtol=2e-2), max_err

    print("KERNEL_OK")
</pallas_src>

<mosaic_0001>
module attributes {stable_mosaic.version = 11 : i64} {
  func.func @segment_head_kernel(%arg0: i32, %arg1: memref<8x2944xbf16, #tpu.memory_space<vmem>>, %arg2: memref<2944x32xbf16, #tpu.memory_space<vmem>>, %arg3: memref<1x32xf32, #tpu.memory_space<vmem>>, %arg4: memref<32x128xbf16, #tpu.memory_space<vmem>>, %arg5: memref<1x128xf32, #tpu.memory_space<vmem>>, %arg6: memref<8x128xbf16, #tpu.memory_space<vmem>>) attributes {dimension_semantics = [#tpu.dimension_semantics<parallel>], iteration_bounds = array<i64: 2>, scalar_prefetch = 0 : i64, scratch_operands = 0 : i64, tpu.core_type = #tpu.core_type<tc>, window_params = [{transform_indices = @transform_0, window_bounds = array<i64: 8, 2944>}, {pipeline_mode = #tpu.pipeline_mode<synchronous>, transform_indices = @transform_1, window_bounds = array<i64: 2944, 32>}, {pipeline_mode = #tpu.pipeline_mode<synchronous>, transform_indices = @transform_2, window_bounds = array<i64: 1, 32>}, {pipeline_mode = #tpu.pipeline_mode<synchronous>, transform_indices = @transform_3, window_bounds = array<i64: 32, 128>}, {pipeline_mode = #tpu.pipeline_mode<synchronous>, transform_indices = @transform_4, window_bounds = array<i64: 1, 128>}, {transform_indices = @transform_5, window_bounds = array<i64: 8, 128>}]} {
    %c0 = arith.constant 0 : index
    %c0_0 = arith.constant 0 : index
    %0 = vector.load %arg1[%c0, %c0_0] : memref<8x2944xbf16, #tpu.memory_space<vmem>>, vector<8x2944xbf16>
    %c0_1 = arith.constant 0 : index
    %c0_2 = arith.constant 0 : index
    %1 = vector.load %arg2[%c0_1, %c0_2] : memref<2944x32xbf16, #tpu.memory_space<vmem>>, vector<2944x32xbf16>
    %cst = arith.constant dense<0.000000e+00> : vector<8x32xf32>
    %2 = tpu.matmul %0, %1, %cst {dimension_numbers = #tpu.dot_dimension_numbers<[1], [0], [0], [1], [0, 0, 1, 1], [], []>} : vector<8x2944xbf16>, vector<2944x32xbf16>, vector<8x32xf32> -> vector<8x32xf32>
    %c0_3 = arith.constant 0 : index
    %c0_4 = arith.constant 0 : index
    %3 = vector.load %arg3[%c0_3, %c0_4] : memref<1x32xf32, #tpu.memory_space<vmem>>, vector<1x32xf32>
    %4 = vector.broadcast %3 : vector<1x32xf32> to vector<8x32xf32>
    %5 = arith.addf %2, %4 : vector<8x32xf32>
    %cst_5 = arith.constant 0.000000e+00 : f32
    %6 = vector.broadcast %cst_5 : f32 to vector<8x32xf32>
    %7 = arith.maximumf %5, %6 : vector<8x32xf32>
    %8 = arith.truncf %7 : vector<8x32xf32> to vector<8x32xbf16>
    %c0_6 = arith.constant 0 : index
    %c0_7 = arith.constant 0 : index
    %9 = vector.load %arg4[%c0_6, %c0_7] : memref<32x128xbf16, #tpu.memory_space<vmem>>, vector<32x128xbf16>
    %cst_8 = arith.constant dense<0.000000e+00> : vector<8x128xf32>
    %10 = tpu.matmul %8, %9, %cst_8 {dimension_numbers = #tpu.dot_dimension_numbers<[1], [0], [0], [1], [0, 0, 1, 1], [], []>} : vector<8x32xbf16>, vector<32x128xbf16>, vector<8x128xf32> -> vector<8x128xf32>
    %c0_9 = arith.constant 0 : index
    %c0_10 = arith.constant 0 : index
    %11 = vector.load %arg5[%c0_9, %c0_10] : memref<1x128xf32, #tpu.memory_space<vmem>>, vector<1x128xf32>
    %12 = vector.broadcast %11 : vector<1x128xf32> to vector<8x128xf32>
    %13 = arith.addf %10, %12 : vector<8x128xf32>
    %14 = arith.truncf %13 : vector<8x128xf32> to vector<8x128xbf16>
    %c0_11 = arith.constant 0 : index
    %c0_12 = arith.constant 0 : index
    %15 = vector.load %arg6[%c0_11, %c0_12] : memref<8x128xbf16, #tpu.memory_space<vmem>>, vector<8x128xbf16>
    tpu.vector_store %arg6[%c0_11, %c0_12], %14 {strides = array<i32>} : memref<8x128xbf16, #tpu.memory_space<vmem>>, vector<8x128xbf16>,
    return
  }
  func.func @transform_0(%arg0: i32) -> (i32, i32) {
    %c0_i32 = arith.constant 0 : i32
    %c0_i32_0 = arith.constant 0 : i32
    return %arg0, %c0_i32 : i32, i32
  }
  func.func @transform_1(%arg0: i32) -> (i32, i32) {
    %c0_i32 = arith.constant 0 : i32
    %c0_i32_0 = arith.constant 0 : i32
    %c0_i32_1 = arith.constant 0 : i32
    return %c0_i32, %c0_i32_0 : i32, i32
  }
  func.func @transform_2(%arg0: i32) -> (i32, i32) {
    %c0_i32 = arith.constant 0 : i32
    %c0_i32_0 = arith.constant 0 : i32
    %c0_i32_1 = arith.constant 0 : i32
    return %c0_i32, %c0_i32_0 : i32, i32
  }
  func.func @transform_3(%arg0: i32) -> (i32, i32) {
    %c0_i32 = arith.constant 0 : i32
    %c0_i32_0 = arith.constant 0 : i32
    %c0_i32_1 = arith.constant 0 : i32
    return %c0_i32, %c0_i32_0 : i32, i32
  }
  func.func @transform_4(%arg0: i32) -> (i32, i32) {
    %c0_i32 = arith.constant 0 : i32
    %c0_i32_0 = arith.constant 0 : i32
    %c0_i32_1 = arith.constant 0 : i32
    return %c0_i32, %c0_i32_0 : i32, i32
  }
  func.func @transform_5(%arg0: i32) -> (i32, i32) {
    %c0_i32 = arith.constant 0 : i32
    %c0_i32_0 = arith.constant 0 : i32
    return %arg0, %c0_i32 : i32, i32
  }
}

</mosaic_0001>

<llo_original>
// kernel: tpu_custom_call.1
$region0: #{tpu_custom_call.1}
  #allocation0 [shape = 'u32[]', space=smem, size = 0x4, offset = 0x4, fixed_abs, tag = 'smem constant byte address 0x4 - core index']
  #allocation1 [shape = 'u32[144,128]{1,0:T(1,128)}', space=vmem, size = 0x12000, scoped, tag = 'internal scratch']
  %s0 = inlined_call_operand.vmem [shape: bf16[16,2944], index: 0, kind: input, shape index: {}]
  %s1 = inlined_call_operand.vmem [shape: bf16[2944,32], index: 1, kind: input, shape index: {}]
  %s2 = inlined_call_operand.vmem [shape: f32[1,32], index: 2, kind: input, shape index: {}]
  %s3 = inlined_call_operand.vmem [shape: bf16[32,128], index: 3, kind: input, shape index: {}]
  %s4 = inlined_call_operand.vmem [shape: f32[1,128], index: 4, kind: input, shape index: {}]
  %s5 = inlined_call_operand.hbm [shape: bf16[16,128], index: 5, kind: output, shape index: {}]
  %s6 = sld [smem:[#allocation0]]
  $region53: #{tpu_custom_call.1} parent=0
    _
  %s8 = ssub.s32 1, %s6
  %s9 = scalar_select 0, %s8, %s6
  $region1: #{tpu_custom_call.1} parent=0
    #allocation2 [shape = 'u8[4096]{0}', space=vmem, size = 0x1000, scoped, tag = 'output window, operand 0']
    #allocation3 [shape = 's32[2]{0}', space=sflag, size = 0x8, scoped, tag = 'scoped memory for tpu_custom_call.1']
    %10 = vsyncpa [#allocation3], 0
    %s11 = scalar_lea.sflag [#allocation3], 1
    %12 = vsyncpa %s11, 0
    loop: start=0, step=1, limit=4
    $region2: #{tpu_custom_call.1} parent=1 // loop_pre_header
      _
    $region3: #{tpu_custom_call.1} parent=1 // loop_header
      %s14 = sphi 0, %s18
      %p15 = scmp.ge.s32.totalorder %s14, 4
      %s24 = sphi 0, %s26
      %s27 = sphi 0, %s24
      %s28 = sphi 0, %s27
      %s44 = sphi 0, %s28
      %s48 = sphi 0, %s48
      %s50 = sphi 0, %s48
      %s51 = sphi 0, %s50
      %s65 = sphi 0, %s51
      %s69 = sphi 0, %s69
      %s71 = sphi 0, %s69
      %s72 = sphi 0, %s71
      %s86 = sphi 0, %s72
      %s90 = sphi 0, %s90
      %s92 = sphi 0, %s90
      %s93 = sphi 0, %s92
      %s107 = sphi 0, %s93
      %s111 = sphi 0, %s111
      %s113 = sphi 0, %s111
      %s114 = sphi 0, %s113
      %s128 = sphi 0, %s114
      %s134 = sphi 0, %s136
      %s137 = sphi 0, %s134
      %s138 = sphi 0, %s137
      %s154 = sphi 0, %s138
    $region4: #{tpu_custom_call.1} parent=1 // loop_header_branch
      %17 = sbr.rel (%p15) target = $region8
    $region5: #{tpu_custom_call.1} parent=1 // loop_body
      %s19 = ssub.s32 %s14, 1
      %s20 = ssub.s32 %s14, 2
      %s21 = sadd.s32 %s14, 1
      %s22 = ssub.s32 %s14, %s21
      %p23 = scmp.eq.s32.totalorder %s22, 0
      %s25 = sadd.s32 %s24, 1
      %s26 = scalar_select %p23, %s24, %s25
      %p29 = pneg %p23
      %p30 = scmp.eq.s32.totalorder %s14, 1
      %p31 = por %p29, %p30
      %p32 = scmp.ne.s32.totalorder %s24, %s27
      %p33 = scmp.eq.s32.totalorder %s14, 0
      %p34 = por %p32, %p33
      %p35 = scmp.ne.s32.totalorder %s24, %s27
      %p36 = scmp.eq.s32.totalorder %s19, 1
      %p37 = por %p35, %p36
      %p38 = scmp.ne.s32.totalorder %s27, %s28
      %p39 = scmp.eq.s32.totalorder %s19, 0
      %p40 = por %p38, %p39
      %p41 = scmp.ne.s32.totalorder %s27, %s28
      %p42 = scmp.eq.s32.totalorder %s20, 1
      %p43 = por %p41, %p42
      %p45 = scmp.ne.s32.totalorder %s28, %s44
      %p46 = scmp.eq.s32.totalorder %s20, 0
      %p47 = por %p45, %p46
      %s49 = sadd.s32 %s48, 1
      %p52 = scmp.eq.s32.totalorder %s14, 1
      %p53 = scmp.ne.s32.totalorder %s48, %s50
      %p54 = scmp.eq.s32.totalorder %s14, 0
      %p55 = por %p53, %p54
      %p56 = scmp.ne.s32.totalorder %s48, %s50
      %p57 = scmp.eq.s32.totalorder %s19, 1
      %p58 = por %p56, %p57
      %p59 = scmp.ne.s32.totalorder %s50, %s51
      %p60 = scmp.eq.s32.totalorder %s19, 0
      %p61 = por %p59, %p60
      %p62 = scmp.ne.s32.totalorder %s50, %s51
      %p63 = scmp.eq.s32.totalorder %s20, 1
      %p64 = por %p62, %p63
      %p66 = scmp.ne.s32.totalorder %s51, %s65
      %p67 = scmp.eq.s32.totalorder %s20, 0
      %p68 = por %p66, %p67
      %s70 = sadd.s32 %s69, 1
      %p73 = scmp.eq.s32.totalorder %s14, 1
      %p74 = scmp.ne.s32.totalorder %s69, %s71
      %p75 = scmp.eq.s32.totalorder %s14, 0
      %p76 = por %p74, %p75
      %p77 = scmp.ne.s32.totalorder %s69, %s71
      %p78 = scmp.eq.s32.totalorder %s19, 1
      %p79 = por %p77, %p78
      %p80 = scmp.ne.s32.totalorder %s71, %s72
      %p81 = scmp.eq.s32.totalorder %s19, 0
      %p82 = por %p80, %p81
      %p83 = scmp.ne.s32.totalorder %s71, %s72
      %p84 = scmp.eq.s32.totalorder %s20, 1
      %p85 = por %p83, %p84
      %p87 = scmp.ne.s32.totalorder %s72, %s86
      %p88 = scmp.eq.s32.totalorder %s20, 0
      %p89 = por %p87, %p88
      %s91 = sadd.s32 %s90, 1
      %p94 = scmp.eq.s32.totalorder %s14, 1
      %p95 = scmp.ne.s32.totalorder %s90, %s92
      %p96 = scmp.eq.s32.totalorder %s14, 0
      %p97 = por %p95, %p96
      %p98 = scmp.ne.s32.totalorder %s90, %s92
      %p99 = scmp.eq.s32.totalorder %s19, 1
      %p100 = por %p98, %p99
      %p101 = scmp.ne.s32.totalorder %s92, %s93
      %p102 = scmp.eq.s32.totalorder %s19, 0
      %p103 = por %p101, %p102
      %p104 = scmp.ne.s32.totalorder %s92, %s93
      %p105 = scmp.eq.s32.totalorder %s20, 1
      %p106 = por %p104, %p105
      %p108 = scmp.ne.s32.totalorder %s93, %s107
      %p109 = scmp.eq.s32.totalorder %s20, 0
      %p110 = por %p108, %p109
      %s112 = sadd.s32 %s111, 1
      %p115 = scmp.eq.s32.totalorder %s14, 1
      %p116 = scmp.ne.s32.totalorder %s111, %s113
      %p117 = scmp.eq.s32.totalorder %s14, 0
      %p118 = por %p116, %p117
      %p119 = scmp.ne.s32.totalorder %s111, %s113
      %p120 = scmp.eq.s32.totalorder %s19, 1
      %p121 = por %p119, %p120
      %p122 = scmp.ne.s32.totalorder %s113, %s114
      %p123 = scmp.eq.s32.totalorder %s19, 0
      %p124 = por %p122, %p123
      %p125 = scmp.ne.s32.totalorder %s113, %s114
      %p126 = scmp.eq.s32.totalorder %s20, 1
      %p127 = por %p125, %p126
      %p129 = scmp.ne.s32.totalorder %s114, %s128
      %p130 = scmp.eq.s32.totalorder %s20, 0
      %p131 = por %p129, %p130
      %s132 = ssub.s32 %s14, %s21
      %p133 = scmp.eq.s32.totalorder %s132, 0
      %s135 = sadd.s32 %s134, 1
      %s136 = scalar_select %p133, %s134, %s135
      %p139 = pneg %p133
      %p140 = scmp.eq.s32.totalorder %s14, 1
      %p141 = por %p139, %p140
      %p142 = scmp.ne.s32.totalorder %s134, %s137
      %p143 = scmp.eq.s32.totalorder %s14, 0
      %p144 = por %p142, %p143
      %p145 = scmp.ne.s32.totalorder %s134, %s137
      %p146 = scmp.eq.s32.totalorder %s19, 1
      %p147 = por %p145, %p146
      %p148 = scmp.ne.s32.totalorder %s137, %s138
      %p149 = scmp.eq.s32.totalorder %s19, 0
      %p150 = por %p148, %p149
      %p151 = scmp.ne.s32.totalorder %s137, %s138
      %p152 = scmp.eq.s32.totalorder %s20, 1
      %p153 = por %p151, %p152
      %p155 = scmp.ne.s32.totalorder %s138, %s154
      %p156 = scmp.eq.s32.totalorder %s20, 0
      %p157 = por %p155, %p156
      %p158 = scmp.le.s32.totalorder 1, %s14
      %p159 = scmp.lt.s32.totalorder %s14, 3
      %p160 = pnand %p158, %p159
      %p161 = pneg %p160
      // Predicated region
      $region9: #{tpu_custom_call.1} parent=5 // pred_check
        _
      $region10: #{tpu_custom_call.1} parent=5 // pred_check_branch
        %163 = sbr.rel (%p160) target = $region12
      $region11: #{tpu_custom_call.1} parent=5 // pred_region
        %s164 = ssub.s32 %s14, 1
        // Predicated region
        $region13: #{tpu_custom_call.1} parent=11 // pred_check
          %p165 = pneg %p61
        $region14: #{tpu_custom_call.1} parent=11 // pred_check_branch
          %167 = sbr.rel (%p165) target = $region16
        $region15: #{tpu_custom_call.1} parent=11 // pred_region
          _
        $region16: #{tpu_custom_call.1} parent=11 // pred_fallthru
          _
        // Predicated region
        $region17: #{tpu_custom_call.1} parent=11 // pred_check
          %p168 = pneg %p82
        $region18: #{tpu_custom_call.1} parent=11 // pred_check_branch
          %170 = sbr.rel (%p168) target = $region20
        $region19: #{tpu_custom_call.1} parent=11 // pred_region
          _
        $region20: #{tpu_custom_call.1} parent=11 // pred_fallthru
          _
        // Predicated region
        $region21: #{tpu_custom_call.1} parent=11 // pred_check
          %p171 = pneg %p103
        $region22: #{tpu_custom_call.1} parent=11 // pred_check_branch
          %173 = sbr.rel (%p171) target = $region24
        $region23: #{tpu_custom_call.1} parent=11 // pred_region
          _
        $region24: #{tpu_custom_call.1} parent=11 // pred_fallthru
          _
        // Predicated region
        $region25: #{tpu_custom_call.1} parent=11 // pred_check
          %p174 = pneg %p124
        $region26: #{tpu_custom_call.1} parent=11 // pred_check_branch
          %176 = sbr.rel (%p174) target = $region28
        $region27: #{tpu_custom_call.1} parent=11 // pred_region
          _
        $region28: #{tpu_custom_call.1} parent=11 // pred_fallthru
          _
      $region12: #{tpu_custom_call.1} parent=5 // pred_fallthru
        _
      %p177 = scmp.lt.s32.totalorder %s14, 2
      // Predicated region
      $region29: #{tpu_custom_call.1} parent=5 // pred_check
        %p178 = pneg %p177
      $region30: #{tpu_custom_call.1} parent=5 // pred_check_branch
        %180 = sbr.rel (%p178) target = $region32
      $region31: #{tpu_custom_call.1} parent=5 // pred_region
        // Predicated region
        $region33: #{tpu_custom_call.1} parent=31 // pred_check
          %p181 = pneg %p34
        $region34: #{tpu_custom_call.1} parent=31 // pred_check_branch
          %183 = sbr.rel (%p181) target = $region36
        $region35: #{tpu_custom_call.1} parent=31 // pred_region
          %p184 = scmp.lt.s32.totalorder %s14, 1
          %s185 = scalar_select %p184, %s14, 1
          %s186 = smul.addr %s185, 23
          %s187 = smul.addr %s186, 4
          %s188 = scalar_lea.vmem %s0, %s187
        $region36: #{tpu_custom_call.1} parent=31 // pred_fallthru
          _
      $region32: #{tpu_custom_call.1} parent=5 // pred_fallthru
        _
      %p189 = scmp.le.s32.totalorder 1, %s14
      %p190 = scmp.lt.s32.totalorder %s14, 3
      %p191 = pnand %p189, %p190
      %p192 = pneg %p191
      // Predicated region
      $region37: #{tpu_custom_call.1} parent=5 // pred_check
        _
      $region38: #{tpu_custom_call.1} parent=5 // pred_check_branch
        %194 = sbr.rel (%p191) target = $region40
      $region39: #{tpu_custom_call.1} parent=5 // pred_region
        %s195 = ssub.s32 %s14, 1
        %p196 = scmp.lt.s32.totalorder %s19, 1
        %s197 = scalar_select %p196, %s19, 1
        %s198 = smul.addr %s197, 23
        %s199 = smul.addr %s198, 4
        %s200 = scalar_lea.vmem %s0, %s199
        %p201 = pneg %p40
        %p202 = pneg %p37
        %p203 = pneg %p61
        %p204 = pneg %p58
        %p205 = pneg %p82
        %p206 = pneg %p79
        %p207 = pneg %p103
        %p208 = pneg %p100
        %p209 = pneg %p124
        %p210 = pneg %p121
        %p211 = pneg %p150
        %p212 = pneg %p147
        %s213 = sand.u32 %s137, 1
        %s214 = scalar_lea.sflag [#allocation3], %s213
        %s215 = sand.u32 %s137, 1
        %s216 = smul.addr %s215, 4
        %s217 = scalar_lea.vmem [#allocation2], %s216
        %p218 = scmp.lt.s32.totalorder %s19, 1
        %s219 = scalar_select %p218, %s19, 1
        %s220 = smul.addr %s219, 23
        %s221 = smul.addr %s220, 4
        %s222 = scalar_lea.vmem %s0, %s221
        %v224 = vld [vmem:[%s222] sm:$0xff]
        %v225 = vld [vmem:[%s222 + $0x8] sm:$0xff]
        %v226 = vld [vmem:[%s222 + $0x10] sm:$0xff]
        %v227 = vld [vmem:[%s222 + $0x18] sm:$0xff]
        %v228 = vld [vmem:[%s222 + $0x20] sm:$0xff]
        %v229 = vld [vmem:[%s222 + $0x28] sm:$0xff]
        %v230 = vld [vmem:[%s222 + $0x30] sm:$0xff]
        %v231 = vld [vmem:[%s222 + $0x38] sm:$0xff]
        %v232 = vld [vmem:[%s222 + $0x40] sm:$0xff]
        %v233 = vld [vmem:[%s222 + $0x48] sm:$0xff]
        %v234 = vld [vmem:[%s222 + $0x50] sm:$0xff]
        %v235 = vld [vmem:[%s222 + $0x58] sm:$0xf]
        %v236 = vld [vmem:[%s1] sm:$0xf]
        %v237 = vld [vmem:[%s1 + $0x4] sm:$0xf]
        %v238 = vld [vmem:[%s1 + $0x8] sm:$0xf]
        %v239 = vld [vmem:[%s1 + $0xc] sm:$0xf]
        %v240 = vld [vmem:[%s1 + $0x10] sm:$0xf]
        %v241 = vld [vmem:[%s1 + $0x14] sm:$0xf]
        %v242 = vld [vmem:[%s1 + $0x18] sm:$0xf]
        %v243 = vld [vmem:[%s1 + $0x1c] sm:$0xf]
        %v244 = vld [vmem:[%s1 + $0x20] sm:$0xf]
        %v245 = vld [vmem:[%s1 + $0x24] sm:$0xf]
        %v246 = vld [vmem:[%s1 + $0x28] sm:$0xf]
        %v247 = vld [vmem:[%s1 + $0x2c] sm:$0xf]
        %v248 = vld [vmem:[%s1 + $0x30] sm:$0xf]
        %v249 = vld [vmem:[%s1 + $0x34] sm:$0xf]
        %v250 = vld [vmem:[%s1 + $0x38] sm:$0xf]
        %v251 = vld [vmem:[%s1 + $0x3c] sm:$0xf]
        %v252 = vld [vmem:[%s1 + $0x40] sm:$0xf]
        %v253 = vld [vmem:[%s1 + $0x44] sm:$0xf]
        %v254 = vld [vmem:[%s1 + $0x48] sm:$0xf]
        %v255 = vld [vmem:[%s1 + $0x4c] sm:$0xf]
        %v256 = vld [vmem:[%s1 + $0x50] sm:$0xf]
        %v257 = vld [vmem:[%s1 + $0x54] sm:$0xf]
        %v258 = vld [vmem:[%s1 + $0x58] sm:$0xf]
        %v259 = vld [vmem:[%s1 + $0x5c] sm:$0xf]
        %v260 = vld [vmem:[%s1 + $0x60] sm:$0xf]
        %v261 = vld [vmem:[%s1 + $0x64] sm:$0xf]
        %v262 = vld [vmem:[%s1 + $0x68] sm:$0xf]
        %v263 = vld [vmem:[%s1 + $0x6c] sm:$0xf]
        %v264 = vld [vmem:[%s1 + $0x70] sm:$0xf]
        %v265 = vld [vmem:[%s1 + $0x74] sm:$0xf]
        %v266 = vld [vmem:[%s1 + $0x78] sm:$0xf]
        %v267 = vld [vmem:[%s1 + $0x7c] sm:$0xf]
        %v268 = vld [vmem:[%s1 + $0x80] sm:$0xf]
        %v269 = vld [vmem:[%s1 + $0x84] sm:$0xf]
        %v270 = vld [vmem:[%s1 + $0x88] sm:$0xf]
        %v271 = vld [vmem:[%s1 + $0x8c] sm:$0xf]
        %v272 = vld [vmem:[%s1 + $0x90] sm:$0xf]
        %v273 = vld [vmem:[%s1 + $0x94] sm:$0xf]
        %v274 = vld [vmem:[%s1 + $0x98] sm:$0xf]
        %v275 = vld [vmem:[%s1 + $0x9c] sm:$0xf]
        %v276 = vld [vmem:[%s1 + $0xa0] sm:$0xf]
        %v277 = vld [vmem:[%s1 + $0xa4] sm:$0xf]
        %v278 = vld [vmem:[%s1 + $0xa8] sm:$0xf]
        %v279 = vld [vmem:[%s1 + $0xac] sm:$0xf]
        %v280 = vld [vmem:[%s1 + $0xb0] sm:$0xf]
        %v281 = vld [vmem:[%s1 + $0xb4] sm:$0xf]
        %v282 = vld [vmem:[%s1 + $0xb8] sm:$0xf]
        %v283 = vld [vmem:[%s1 + $0xbc] sm:$0xf]
        %v284 = vld [vmem:[%s1 + $0xc0] sm:$0xf]
        %v285 = vld [vmem:[%s1 + $0xc4] sm:$0xf]
        %v286 = vld [vmem:[%s1 + $0xc8] sm:$0xf]
        %v287 = vld [vmem:[%s1 + $0xcc] sm:$0xf]
        %v288 = vld [vmem:[%s1 + $0xd0] sm:$0xf]
        %v289 = vld [vmem:[%s1 + $0xd4] sm:$0xf]
        %v290 = vld [vmem:[%s1 + $0xd8] sm:$0xf]
        %v291 = vld [vmem:[%s1 + $0xdc] sm:$0xf]
        %v292 = vld [vmem:[%s1 + $0xe0] sm:$0xf]
        %v293 = vld [vmem:[%s1 + $0xe4] sm:$0xf]
        %v294 = vld [vmem:[%s1 + $0xe8] sm:$0xf]
        %v295 = vld [vmem:[%s1 + $0xec] sm:$0xf]
        %v296 = vld [vmem:[%s1 + $0xf0] sm:$0xf]
        %v297 = vld [vmem:[%s1 + $0xf4] sm:$0xf]
        %v298 = vld [vmem:[%s1 + $0xf8] sm:$0xf]
        %v299 = vld [vmem:[%s1 + $0xfc] sm:$0xf]
        %v300 = vld [vmem:[%s1 + $0x100] sm:$0xf]
        %v301 = vld [vmem:[%s1 + $0x104] sm:$0xf]
        %v302 = vld [vmem:[%s1 + $0x108] sm:$0xf]
        %v303 = vld [vmem:[%s1 + $0x10c] sm:$0xf]
        %v304 = vld [vmem:[%s1 + $0x110] sm:$0xf]
        %v305 = vld [vmem:[%s1 + $0x114] sm:$0xf]
        %v306 = vld [vmem:[%s1 + $0x118] sm:$0xf]
        %v307 = vld [vmem:[%s1 + $0x11c] sm:$0xf]
        %v308 = vld [vmem:[%s1 + $0x120] sm:$0xf]
        %v309 = vld [vmem:[%s1 + $0x124] sm:$0xf]
        %v310 = vld [vmem:[%s1 + $0x128] sm:$0xf]
        %v311 = vld [vmem:[%s1 + $0x12c] sm:$0xf]
        %v312 = vld [vmem:[%s1 + $0x130] sm:$0xf]
        %v313 = vld [vmem:[%s1 + $0x134] sm:$0xf]
        %v314 = vld [vmem:[%s1 + $0x138] sm:$0xf]
        %v315 = vld [vmem:[%s1 + $0x13c] sm:$0xf]
        %v316 = vld [vmem:[%s1 + $0x140] sm:$0xf]
        %v317 = vld [vmem:[%s1 + $0x144] sm:$0xf]
        %v318 = vld [vmem:[%s1 + $0x148] sm:$0xf]
        %v319 = vld [vmem:[%s1 + $0x14c] sm:$0xf]
        %v320 = vld [vmem:[%s1 + $0x150] sm:$0xf]
        %v321 = vld [vmem:[%s1 + $0x154] sm:$0xf]
        %v322 = vld [vmem:[%s1 + $0x158] sm:$0xf]
        %v323 = vld [vmem:[%s1 + $0x15c] sm:$0xf]
        %v324 = vld [vmem:[%s1 + $0x160] sm:$0xf]
        %v325 = vld [vmem:[%s1 + $0x164] sm:$0xf]
        %v326 = vld [vmem:[%s1 + $0x168] sm:$0xf]
        %v327 = vld [vmem:[%s1 + $0x16c] sm:$0xf]
        %v328 = vld [vmem:[%s1 + $0x170] sm:$0xf]
        %v329 = vld [vmem:[%s1 + $0x174] sm:$0xf]
        %v330 = vld [vmem:[%s1 + $0x178] sm:$0xf]
        %v331 = vld [vmem:[%s1 + $0x17c] sm:$0xf]
        %v332 = vld [vmem:[%s1 + $0x180] sm:$0xf]
        %v333 = vld [vmem:[%s1 + $0x184] sm:$0xf]
        %v334 = vld [vmem:[%s1 + $0x188] sm:$0xf]
        %v335 = vld [vmem:[%s1 + $0x18c] sm:$0xf]
        %v336 = vld [vmem:[%s1 + $0x190] sm:$0xf]
        %v337 = vld [vmem:[%s1 + $0x194] sm:$0xf]
        %v338 = vld [vmem:[%s1 + $0x198] sm:$0xf]
        %v339 = vld [vmem:[%s1 + $0x19c] sm:$0xf]
        %v340 = vld [vmem:[%s1 + $0x1a0] sm:$0xf]
        %v341 = vld [vmem:[%s1 + $0x1a4] sm:$0xf]
        %v342 = vld [vmem:[%s1 + $0x1a8] sm:$0xf]
        %v343 = vld [vmem:[%s1 + $0x1ac] sm:$0xf]
        %v344 = vld [vmem:[%s1 + $0x1b0] sm:$0xf]
        %v345 = vld [vmem:[%s1 + $0x1b4] sm:$0xf]
        %v346 = vld [vmem:[%s1 + $0x1b8] sm:$0xf]
        %v347 = vld [vmem:[%s1 + $0x1bc] sm:$0xf]
        %v348 = vld [vmem:[%s1 + $0x1c0] sm:$0xf]
        %v349 = vld [vmem:[%s1 + $0x1c4] sm:$0xf]
        %v350 = vld [vmem:[%s1 + $0x1c8] sm:$0xf]
        %v351 = vld [vmem:[%s1 + $0x1cc] sm:$0xf]
        %v352 = vld [vmem:[%s1 + $0x1d0] sm:$0xf]
        %v353 = vld [vmem:[%s1 + $0x1d4] sm:$0xf]
        %v354 = vld [vmem:[%s1 + $0x1d8] sm:$0xf]
        %v355 = vld [vmem:[%s1 + $0x1dc] sm:$0xf]
        %v356 = vld [vmem:[%s1 + $0x1e0] sm:$0xf]
        %v357 = vld [vmem:[%s1 + $0x1e4] sm:$0xf]
        %v358 = vld [vmem:[%s1 + $0x1e8] sm:$0xf]
        %v359 = vld [vmem:[%s1 + $0x1ec] sm:$0xf]
        %v360 = vld [vmem:[%s1 + $0x1f0] sm:$0xf]
        %v361 = vld [vmem:[%s1 + $0x1f4] sm:$0xf]
        %v362 = vld [vmem:[%s1 + $0x1f8] sm:$0xf]
        %v363 = vld [vmem:[%s1 + $0x1fc] sm:$0xf]
        %v364 = vld [vmem:[%s1 + $0x200] sm:$0xf]
        %v365 = vld [vmem:[%s1 + $0x204] sm:$0xf]
        %v366 = vld [vmem:[%s1 + $0x208] sm:$0xf]
        %v367 = vld [vmem:[%s1 + $0x20c] sm:$0xf]
        %v368 = vld [vmem:[%s1 + $0x210] sm:$0xf]
        %v369 = vld [vmem:[%s1 + $0x214] sm:$0xf]
        %v370 = vld [vmem:[%s1 + $0x218] sm:$0xf]
        %v371 = vld [vmem:[%s1 + $0x21c] sm:$0xf]
        %v372 = vld [vmem:[%s1 + $0x220] sm:$0xf]
        %v373 = vld [vmem:[%s1 + $0x224] sm:$0xf]
        %v374 = vld [vmem:[%s1 + $0x228] sm:$0xf]
        %v375 = vld [vmem:[%s1 + $0x22c] sm:$0xf]
        %v376 = vld [vmem:[%s1 + $0x230] sm:$0xf]
        %v377 = vld [vmem:[%s1 + $0x234] sm:$0xf]
        %v378 = vld [vmem:[%s1 + $0x238] sm:$0xf]
        %v379 = vld [vmem:[%s1 + $0x23c] sm:$0xf]
        %v380 = vld [vmem:[%s1 + $0x240] sm:$0xf]
        %v381 = vld [vmem:[%s1 + $0x244] sm:$0xf]
        %v382 = vld [vmem:[%s1 + $0x248] sm:$0xf]
        %v383 = vld [vmem:[%s1 + $0x24c] sm:$0xf]
        %v384 = vld [vmem:[%s1 + $0x250] sm:$0xf]
        %v385 = vld [vmem:[%s1 + $0x254] sm:$0xf]
        %v386 = vld [vmem:[%s1 + $0x258] sm:$0xf]
        %v387 = vld [vmem:[%s1 + $0x25c] sm:$0xf]
        %v388 = vld [vmem:[%s1 + $0x260] sm:$0xf]
        %v389 = vld [vmem:[%s1 + $0x264] sm:$0xf]
        %v390 = vld [vmem:[%s1 + $0x268] sm:$0xf]
        %v391 = vld [vmem:[%s1 + $0x26c] sm:$0xf]
        %v392 = vld [vmem:[%s1 + $0x270] sm:$0xf]
        %v393 = vld [vmem:[%s1 + $0x274] sm:$0xf]
        %v394 = vld [vmem:[%s1 + $0x278] sm:$0xf]
        %v395 = vld [vmem:[%s1 + $0x27c] sm:$0xf]
        %v396 = vld [vmem:[%s1 + $0x280] sm:$0xf]
        %v397 = vld [vmem:[%s1 + $0x284] sm:$0xf]
        %v398 = vld [vmem:[%s1 + $0x288] sm:$0xf]
        %v399 = vld [vmem:[%s1 + $0x28c] sm:$0xf]
        %v400 = vld [vmem:[%s1 + $0x290] sm:$0xf]
        %v401 = vld [vmem:[%s1 + $0x294] sm:$0xf]
        %v402 = vld [vmem:[%s1 + $0x298] sm:$0xf]
        %v403 = vld [vmem:[%s1 + $0x29c] sm:$0xf]
        %v404 = vld [vmem:[%s1 + $0x2a0] sm:$0xf]
        %v405 = vld [vmem:[%s1 + $0x2a4] sm:$0xf]
        %v406 = vld [vmem:[%s1 + $0x2a8] sm:$0xf]
        %v407 = vld [vmem:[%s1 + $0x2ac] sm:$0xf]
        %v408 = vld [vmem:[%s1 + $0x2b0] sm:$0xf]
        %v409 = vld [vmem:[%s1 + $0x2b4] sm:$0xf]
        %v410 = vld [vmem:[%s1 + $0x2b8] sm:$0xf]
        %v411 = vld [vmem:[%s1 + $0x2bc] sm:$0xf]
        %v412 = vld [vmem:[%s1 + $0x2c0] sm:$0xf]
        %v413 = vld [vmem:[%s1 + $0x2c4] sm:$0xf]
        %v414 = vld [vmem:[%s1 + $0x2c8] sm:$0xf]
        %v415 = vld [vmem:[%s1 + $0x2cc] sm:$0xf]
        %v416 = vld [vmem:[%s1 + $0x2d0] sm:$0xf]
        %v417 = vld [vmem:[%s1 + $0x2d4] sm:$0xf]
        %v418 = vld [vmem:[%s1 + $0x2d8] sm:$0xf]
        %v419 = vld [vmem:[%s1 + $0x2dc] sm:$0xf]
        %v420 = vld [vmem:[%s1 + $0x2e0] sm:$0xf]
        %v421 = vld [vmem:[%s1 + $0x2e4] sm:$0xf]
        %v422 = vld [vmem:[%s1 + $0x2e8] sm:$0xf]
        %v423 = vld [vmem:[%s1 + $0x2ec] sm:$0xf]
        %v424 = vld [vmem:[%s1 + $0x2f0] sm:$0xf]
        %v425 = vld [vmem:[%s1 + $0x2f4] sm:$0xf]
        %v426 = vld [vmem:[%s1 + $0x2f8] sm:$0xf]
        %v427 = vld [vmem:[%s1 + $0x2fc] sm:$0xf]
        %v428 = vld [vmem:[%s1 + $0x300] sm:$0xf]
        %v429 = vld [vmem:[%s1 + $0x304] sm:$0xf]
        %v430 = vld [vmem:[%s1 + $0x308] sm:$0xf]
        %v431 = vld [vmem:[%s1 + $0x30c] sm:$0xf]
        %v432 = vld [vmem:[%s1 + $0x310] sm:$0xf]
        %v433 = vld [vmem:[%s1 + $0x314] sm:$0xf]
        %v434 = vld [vmem:[%s1 + $0x318] sm:$0xf]
        %v435 = vld [vmem:[%s1 + $0x31c] sm:$0xf]
        %v436 = vld [vmem:[%s1 + $0x320] sm:$0xf]
        %v437 = vld [vmem:[%s1 + $0x324] sm:$0xf]
        %v438 = vld [vmem:[%s1 + $0x328] sm:$0xf]
        %v439 = vld [vmem:[%s1 + $0x32c] sm:$0xf]
        %v440 = vld [vmem:[%s1 + $0x330] sm:$0xf]
        %v441 = vld [vmem:[%s1 + $0x334] sm:$0xf]
        %v442 = vld [vmem:[%s1 + $0x338] sm:$0xf]
        %v443 = vld [vmem:[%s1 + $0x33c] sm:$0xf]
        %v444 = vld [vmem:[%s1 + $0x340] sm:$0xf]
        %v445 = vld [vmem:[%s1 + $0x344] sm:$0xf]
        %v446 = vld [vmem:[%s1 + $0x348] sm:$0xf]
        %v447 = vld [vmem:[%s1 + $0x34c] sm:$0xf]
        %v448 = vld [vmem:[%s1 + $0x350] sm:$0xf]
        %v449 = vld [vmem:[%s1 + $0x354] sm:$0xf]
        %v450 = vld [vmem:[%s1 + $0x358] sm:$0xf]
        %v451 = vld [vmem:[%s1 + $0x35c] sm:$0xf]
        %v452 = vld [vmem:[%s1 + $0x360] sm:$0xf]
        %v453 = vld [vmem:[%s1 + $0x364] sm:$0xf]
        %v454 = vld [vmem:[%s1 + $0x368] sm:$0xf]
        %v455 = vld [vmem:[%s1 + $0x36c] sm:$0xf]
        %v456 = vld [vmem:[%s1 + $0x370] sm:$0xf]
        %v457 = vld [vmem:[%s1 + $0x374] sm:$0xf]
        %v458 = vld [vmem:[%s1 + $0x378] sm:$0xf]
        %v459 = vld [vmem:[%s1 + $0x37c] sm:$0xf]
        %v460 = vld [vmem:[%s1 + $0x380] sm:$0xf]
        %v461 = vld [vmem:[%s1 + $0x384] sm:$0xf]
        %v462 = vld [vmem:[%s1 + $0x388] sm:$0xf]
        %v463 = vld [vmem:[%s1 + $0x38c] sm:$0xf]
        %v464 = vld [vmem:[%s1 + $0x390] sm:$0xf]
        %v465 = vld [vmem:[%s1 + $0x394] sm:$0xf]
        %v466 = vld [vmem:[%s1 + $0x398] sm:$0xf]
        %v467 = vld [vmem:[%s1 + $0x39c] sm:$0xf]
        %v468 = vld [vmem:[%s1 + $0x3a0] sm:$0xf]
        %v469 = vld [vmem:[%s1 + $0x3a4] sm:$0xf]
        %v470 = vld [vmem:[%s1 + $0x3a8] sm:$0xf]
        %v471 = vld [vmem:[%s1 + $0x3ac] sm:$0xf]
        %v472 = vld [vmem:[%s1 + $0x3b0] sm:$0xf]
        %v473 = vld [vmem:[%s1 + $0x3b4] sm:$0xf]
        %v474 = vld [vmem:[%s1 + $0x3b8] sm:$0xf]
        %v475 = vld [vmem:[%s1 + $0x3bc] sm:$0xf]
        %v476 = vld [vmem:[%s1 + $0x3c0] sm:$0xf]
        %v477 = vld [vmem:[%s1 + $0x3c4] sm:$0xf]
        %v478 = vld [vmem:[%s1 + $0x3c8] sm:$0xf]
        %v479 = vld [vmem:[%s1 + $0x3cc] sm:$0xf]
        %v480 = vld [vmem:[%s1 + $0x3d0] sm:$0xf]
        %v481 = vld [vmem:[%s1 + $0x3d4] sm:$0xf]
        %v482 = vld [vmem:[%s1 + $0x3d8] sm:$0xf]
        %v483 = vld [vmem:[%s1 + $0x3dc] sm:$0xf]
        %v484 = vld [vmem:[%s1 + $0x3e0] sm:$0xf]
        %v485 = vld [vmem:[%s1 + $0x3e4] sm:$0xf]
        %v486 = vld [vmem:[%s1 + $0x3e8] sm:$0xf]
        %v487 = vld [vmem:[%s1 + $0x3ec] sm:$0xf]
        %v488 = vld [vmem:[%s1 + $0x3f0] sm:$0xf]
        %v489 = vld [vmem:[%s1 + $0x3f4] sm:$0xf]
        %v490 = vld [vmem:[%s1 + $0x3f8] sm:$0xf]
        %v491 = vld [vmem:[%s1 + $0x3fc] sm:$0xf]
        %v492 = vld [vmem:[%s1 + $0x400] sm:$0xf]
        %v493 = vld [vmem:[%s1 + $0x404] sm:$0xf]
        %v494 = vld [vmem:[%s1 + $0x408] sm:$0xf]
        %v495 = vld [vmem:[%s1 + $0x40c] sm:$0xf]
        %v496 = vld [vmem:[%s1 + $0x410] sm:$0xf]
        %v497 = vld [vmem:[%s1 + $0x414] sm:$0xf]
        %v498 = vld [vmem:[%s1 + $0x418] sm:$0xf]
        %v499 = vld [vmem:[%s1 + $0x41c] sm:$0xf]
        %v500 = vld [vmem:[%s1 + $0x420] sm:$0xf]
        %v501 = vld [vmem:[%s1 + $0x424] sm:$0xf]
        %v502 = vld [vmem:[%s1 + $0x428] sm:$0xf]
        %v503 = vld [vmem:[%s1 + $0x42c] sm:$0xf]
        %v504 = vld [vmem:[%s1 + $0x430] sm:$0xf]
        %v505 = vld [vmem:[%s1 + $0x434] sm:$0xf]
        %v506 = vld [vmem:[%s1 + $0x438] sm:$0xf]
        %v507 = vld [vmem:[%s1 + $0x43c] sm:$0xf]
        %v508 = vld [vmem:[%s1 + $0x440] sm:$0xf]
        %v509 = vld [vmem:[%s1 + $0x444] sm:$0xf]
        %v510 = vld [vmem:[%s1 + $0x448] sm:$0xf]
        %v511 = vld [vmem:[%s1 + $0x44c] sm:$0xf]
        %v512 = vld [vmem:[%s1 + $0x450] sm:$0xf]
        %v513 = vld [vmem:[%s1 + $0x454] sm:$0xf]
        %v514 = vld [vmem:[%s1 + $0x458] sm:$0xf]
        %v515 = vld [vmem:[%s1 + $0x45c] sm:$0xf]
        %v516 = vld [vmem:[%s1 + $0x460] sm:$0xf]
        %v517 = vld [vmem:[%s1 + $0x464] sm:$0xf]
        %v518 = vld [vmem:[%s1 + $0x468] sm:$0xf]
        %v519 = vld [vmem:[%s1 + $0x46c] sm:$0xf]
        %v520 = vld [vmem:[%s1 + $0x470] sm:$0xf]
        %v521 = vld [vmem:[%s1 + $0x474] sm:$0xf]
        %v522 = vld [vmem:[%s1 + $0x478] sm:$0xf]
        %v523 = vld [vmem:[%s1 + $0x47c] sm:$0xf]
        %v524 = vld [vmem:[%s1 + $0x480] sm:$0xf]
        %v525 = vld [vmem:[%s1 + $0x484] sm:$0xf]
        %v526 = vld [vmem:[%s1 + $0x488] sm:$0xf]
        %v527 = vld [vmem:[%s1 + $0x48c] sm:$0xf]
        %v528 = vld [vmem:[%s1 + $0x490] sm:$0xf]
        %v529 = vld [vmem:[%s1 + $0x494] sm:$0xf]
        %v530 = vld [vmem:[%s1 + $0x498] sm:$0xf]
        %v531 = vld [vmem:[%s1 + $0x49c] sm:$0xf]
        %v532 = vld [vmem:[%s1 + $0x4a0] sm:$0xf]
        %v533 = vld [vmem:[%s1 + $0x4a4] sm:$0xf]
        %v534 = vld [vmem:[%s1 + $0x4a8] sm:$0xf]
        %v535 = vld [vmem:[%s1 + $0x4ac] sm:$0xf]
        %v536 = vld [vmem:[%s1 + $0x4b0] sm:$0xf]
        %v537 = vld [vmem:[%s1 + $0x4b4] sm:$0xf]
        %v538 = vld [vmem:[%s1 + $0x4b8] sm:$0xf]
        %v539 = vld [vmem:[%s1 + $0x4bc] sm:$0xf]
        %v540 = vld [vmem:[%s1 + $0x4c0] sm:$0xf]
        %v541 = vld [vmem:[%s1 + $0x4c4] sm:$0xf]
        %v542 = vld [vmem:[%s1 + $0x4c8] sm:$0xf]
        %v543 = vld [vmem:[%s1 + $0x4cc] sm:$0xf]
        %v544 = vld [vmem:[%s1 + $0x4d0] sm:$0xf]
        %v545 = vld [vmem:[%s1 + $0x4d4] sm:$0xf]
        %v546 = vld [vmem:[%s1 + $0x4d8] sm:$0xf]
        %v547 = vld [vmem:[%s1 + $0x4dc] sm:$0xf]
        %v548 = vld [vmem:[%s1 + $0x4e0] sm:$0xf]
        %v549 = vld [vmem:[%s1 + $0x4e4] sm:$0xf]
        %v550 = vld [vmem:[%s1 + $0x4e8] sm:$0xf]
        %v551 = vld [vmem:[%s1 + $0x4ec] sm:$0xf]
        %v552 = vld [vmem:[%s1 + $0x4f0] sm:$0xf]
        %v553 = vld [vmem:[%s1 + $0x4f4] sm:$0xf]
        %v554 = vld [vmem:[%s1 + $0x4f8] sm:$0xf]
        %v555 = vld [vmem:[%s1 + $0x4fc] sm:$0xf]
        %v556 = vld [vmem:[%s1 + $0x500] sm:$0xf]
        %v557 = vld [vmem:[%s1 + $0x504] sm:$0xf]
        %v558 = vld [vmem:[%s1 + $0x508] sm:$0xf]
        %v559 = vld [vmem:[%s1 + $0x50c] sm:$0xf]
        %v560 = vld [vmem:[%s1 + $0x510] sm:$0xf]
        %v561 = vld [vmem:[%s1 + $0x514] sm:$0xf]
        %v562 = vld [vmem:[%s1 + $0x518] sm:$0xf]
        %v563 = vld [vmem:[%s1 + $0x51c] sm:$0xf]
        %v564 = vld [vmem:[%s1 + $0x520] sm:$0xf]
        %v565 = vld [vmem:[%s1 + $0x524] sm:$0xf]
        %v566 = vld [vmem:[%s1 + $0x528] sm:$0xf]
        %v567 = vld [vmem:[%s1 + $0x52c] sm:$0xf]
        %v568 = vld [vmem:[%s1 + $0x530] sm:$0xf]
        %v569 = vld [vmem:[%s1 + $0x534] sm:$0xf]
        %v570 = vld [vmem:[%s1 + $0x538] sm:$0xf]
        %v571 = vld [vmem:[%s1 + $0x53c] sm:$0xf]
        %v572 = vld [vmem:[%s1 + $0x540] sm:$0xf]
        %v573 = vld [vmem:[%s1 + $0x544] sm:$0xf]
        %v574 = vld [vmem:[%s1 + $0x548] sm:$0xf]
        %v575 = vld [vmem:[%s1 + $0x54c] sm:$0xf]
        %v576 = vld [vmem:[%s1 + $0x550] sm:$0xf]
        %v577 = vld [vmem:[%s1 + $0x554] sm:$0xf]
        %v578 = vld [vmem:[%s1 + $0x558] sm:$0xf]
        %v579 = vld [vmem:[%s1 + $0x55c] sm:$0xf]
        %v580 = vld [vmem:[%s1 + $0x560] sm:$0xf]
        %v581 = vld [vmem:[%s1 + $0x564] sm:$0xf]
        %v582 = vld [vmem:[%s1 + $0x568] sm:$0xf]
        %v583 = vld [vmem:[%s1 + $0x56c] sm:$0xf]
        %v584 = vld [vmem:[%s1 + $0x570] sm:$0xf]
        %v585 = vld [vmem:[%s1 + $0x574] sm:$0xf]
        %v586 = vld [vmem:[%s1 + $0x578] sm:$0xf]
        %v587 = vld [vmem:[%s1 + $0x57c] sm:$0xf]
        %v588 = vld [vmem:[%s1 + $0x580] sm:$0xf]
        %v589 = vld [vmem:[%s1 + $0x584] sm:$0xf]
        %v590 = vld [vmem:[%s1 + $0x588] sm:$0xf]
        %v591 = vld [vmem:[%s1 + $0x58c] sm:$0xf]
        %v592 = vld [vmem:[%s1 + $0x590] sm:$0xf]
        %v593 = vld [vmem:[%s1 + $0x594] sm:$0xf]
        %v594 = vld [vmem:[%s1 + $0x598] sm:$0xf]
        %v595 = vld [vmem:[%s1 + $0x59c] sm:$0xf]
        %v596 = vld [vmem:[%s1 + $0x5a0] sm:$0xf]
        %v597 = vld [vmem:[%s1 + $0x5a4] sm:$0xf]
        %v598 = vld [vmem:[%s1 + $0x5a8] sm:$0xf]
        %v599 = vld [vmem:[%s1 + $0x5ac] sm:$0xf]
        %v600 = vld [vmem:[%s1 + $0x5b0] sm:$0xf]
        %v601 = vld [vmem:[%s1 + $0x5b4] sm:$0xf]
        %v602 = vld [vmem:[%s1 + $0x5b8] sm:$0xf]
        %v603 = vld [vmem:[%s1 + $0x5bc] sm:$0xf]
        %v604 = vld [vmem:[%s2] sm:$0x1]
        %v606 = vlaneseq
        %v607 = vshrl.u32 %v606, 7
        %v608 = vsub.s32 0, %v607
        %v609 = vrot.slane %v604, %v608
        %v623 = vunpack.c.l.b16 %v224
        %v624 = vunpack.c.h.b16 %v224
        %v625 = vunpack.c.l.b16 %v225
        %v626 = vunpack.c.h.b16 %v225
        %v627 = vunpack.c.l.b16 %v226
        %v628 = vunpack.c.h.b16 %v226
        %v629 = vunpack.c.l.b16 %v227
        %v630 = vunpack.c.h.b16 %v227
        %v631 = vunpack.c.l.b16 %v228
        %v632 = vunpack.c.h.b16 %v228
        %v633 = vunpack.c.l.b16 %v229
        %v634 = vunpack.c.h.b16 %v229
        %v635 = vunpack.c.l.b16 %v230
        %v636 = vunpack.c.h.b16 %v230
        %v637 = vunpack.c.l.b16 %v231
        %v638 = vunpack.c.h.b16 %v231
        %v639 = vunpack.c.l.b16 %v232
        %v640 = vunpack.c.h.b16 %v232
        %v641 = vunpack.c.l.b16 %v233
        %v642 = vunpack.c.h.b16 %v233
        %v643 = vunpack.c.l.b16 %v234
        %v644 = vunpack.c.h.b16 %v234
        %v645 = vunpack.c.l.b16 %v235
        %v646 = vpack.c.b16 %v623, %v623
        %v647 = vpack.c.b16 %v624, %v624
        %v648 = vpack.c.b16 %v625, %v625
        %v649 = vpack.c.b16 %v626, %v626
        %v650 = vpack.c.b16 %v627, %v627
        %v651 = vpack.c.b16 %v628, %v628
        %v652 = vpack.c.b16 %v629, %v629
        %v653 = vpack.c.b16 %v630, %v630
        %v654 = vpack.c.b16 %v631, %v631
        %v655 = vpack.c.b16 %v632, %v632
        %v656 = vpack.c.b16 %v633, %v633
        %v657 = vpack.c.b16 %v634, %v634
        %v658 = vpack.c.b16 %v635, %v635
        %v659 = vpack.c.b16 %v636, %v636
        %v660 = vpack.c.b16 %v637, %v637
        %v661 = vpack.c.b16 %v638, %v638
        %v662 = vpack.c.b16 %v639, %v639
        %v663 = vpack.c.b16 %v640, %v640
        %v664 = vpack.c.b16 %v641, %v641
        %v665 = vpack.c.b16 %v642, %v642
        %v666 = vpack.c.b16 %v643, %v643
        %v667 = vpack.c.b16 %v644, %v644
        %v668 = vpack.c.b16 %v645, %v645
        %v1060 = vunpack.c.l.b16 %v236
        %v1061 = vunpack.c.l.b16 %v237
        %v1062 = vunpack.c.l.b16 %v238
        %v1063 = vunpack.c.l.b16 %v239
        %v1064 = vunpack.c.l.b16 %v240
        %v1065 = vunpack.c.l.b16 %v241
        %v1066 = vunpack.c.l.b16 %v242
        %v1067 = vunpack.c.l.b16 %v243
        %v1068 = vunpack.c.l.b16 %v244
        %v1069 = vunpack.c.l.b16 %v245
        %v1070 = vunpack.c.l.b16 %v246
        %v1071 = vunpack.c.l.b16 %v247
        %v1072 = vunpack.c.l.b16 %v248
        %v1073 = vunpack.c.l.b16 %v249
        %v1074 = vunpack.c.l.b16 %v250
        %v1075 = vunpack.c.l.b16 %v251
        %v1076 = vunpack.c.l.b16 %v252
        %v1077 = vunpack.c.l.b16 %v253
        %v1078 = vunpack.c.l.b16 %v254
        %v1079 = vunpack.c.l.b16 %v255
        %v1080 = vunpack.c.l.b16 %v256
        %v1081 = vunpack.c.l.b16 %v257
        %v1082 = vunpack.c.l.b16 %v258
        %v1083 = vunpack.c.l.b16 %v259
        %v1084 = vunpack.c.l.b16 %v260
        %v1085 = vunpack.c.l.b16 %v261
        %v1086 = vunpack.c.l.b16 %v262
        %v1087 = vunpack.c.l.b16 %v263
        %v1088 = vunpack.c.l.b16 %v264
        %v1089 = vunpack.c.l.b16 %v265
        %v1090 = vunpack.c.l.b16 %v266
        %v1091 = vunpack.c.l.b16 %v267
        %v1092 = vunpack.c.l.b16 %v268
        %v1093 = vunpack.c.l.b16 %v269
        %v1094 = vunpack.c.l.b16 %v270
        %v1095 = vunpack.c.l.b16 %v271
        %v1096 = vunpack.c.l.b16 %v272
        %v1097 = vunpack.c.l.b16 %v273
        %v1098 = vunpack.c.l.b16 %v274
        %v1099 = vunpack.c.l.b16 %v275
        %v1100 = vunpack.c.l.b16 %v276
        %v1101 = vunpack.c.l.b16 %v277
        %v1102 = vunpack.c.l.b16 %v278
        %v1103 = vunpack.c.l.b16 %v279
        %v1104 = vunpack.c.l.b16 %v280
        %v1105 = vunpack.c.l.b16 %v281
        %v1106 = vunpack.c.l.b16 %v282
        %v1107 = vunpack.c.l.b16 %v283
        %v1108 = vunpack.c.l.b16 %v284
        %v1109 = vunpack.c.l.b16 %v285
        %v1110 = vunpack.c.l.b16 %v286
        %v1111 = vunpack.c.l.b16 %v287
        %v1112 = vunpack.c.l.b16 %v288
        %v1113 = vunpack.c.l.b16 %v289
        %v1114 = vunpack.c.l.b16 %v290
        %v1115 = vunpack.c.l.b16 %v291
        %v1116 = vunpack.c.l.b16 %v292
        %v1117 = vunpack.c.l.b16 %v293
        %v1118 = vunpack.c.l.b16 %v294
        %v1119 = vunpack.c.l.b16 %v295
        %v1120 = vunpack.c.l.b16 %v296
        %v1121 = vunpack.c.l.b16 %v297
        %v1122 = vunpack.c.l.b16 %v298
        %v1123 = vunpack.c.l.b16 %v299
        %v1124 = vunpack.c.l.b16 %v300
        %v1125 = vunpack.c.l.b16 %v301
        %v1126 = vunpack.c.l.b16 %v302
        %v1127 = vunpack.c.l.b16 %v303
        %v1128 = vunpack.c.l.b16 %v304
        %v1129 = vunpack.c.l.b16 %v305
        %v1130 = vunpack.c.l.b16 %v306
        %v1131 = vunpack.c.l.b16 %v307
        %v1132 = vunpack.c.l.b16 %v308
        %v1133 = vunpack.c.l.b16 %v309
        %v1134 = vunpack.c.l.b16 %v310
        %v1135 = vunpack.c.l.b16 %v311
        %v1136 = vunpack.c.l.b16 %v312
        %v1137 = vunpack.c.l.b16 %v313
        %v1138 = vunpack.c.l.b16 %v314
        %v1139 = vunpack.c.l.b16 %v315
        %v1140 = vunpack.c.l.b16 %v316
        %v1141 = vunpack.c.l.b16 %v317
        %v1142 = vunpack.c.l.b16 %v318
        %v1143 = vunpack.c.l.b16 %v319
        %v1144 = vunpack.c.l.b16 %v320
        %v1145 = vunpack.c.l.b16 %v321
        %v1146 = vunpack.c.l.b16 %v322
        %v1147 = vunpack.c.l.b16 %v323
        %v1148 = vunpack.c.l.b16 %v324
        %v1149 = vunpack.c.l.b16 %v325
        %v1150 = vunpack.c.l.b16 %v326
        %v1151 = vunpack.c.l.b16 %v327
        %v1152 = vunpack.c.l.b16 %v328
        %v1153 = vunpack.c.l.b16 %v329
        %v1154 = vunpack.c.l.b16 %v330
        %v1155 = vunpack.c.l.b16 %v331
        %v1156 = vunpack.c.l.b16 %v332
        %v1157 = vunpack.c.l.b16 %v333
        %v1158 = vunpack.c.l.b16 %v334
        %v1159 = vunpack.c.l.b16 %v335
        %v1160 = vunpack.c.l.b16 %v336
        %v1161 = vunpack.c.l.b16 %v337
        %v1162 = vunpack.c.l.b16 %v338
        %v1163 = vunpack.c.l.b16 %v339
        %v1164 = vunpack.c.l.b16 %v340
        %v1165 = vunpack.c.l.b16 %v341
        %v1166 = vunpack.c.l.b16 %v342
        %v1167 = vunpack.c.l.b16 %v343
        %v1168 = vunpack.c.l.b16 %v344
        %v1169 = vunpack.c.l.b16 %v345
        %v1170 = vunpack.c.l.b16 %v346
        %v1171 = vunpack.c.l.b16 %v347
        %v1172 = vunpack.c.l.b16 %v348
        %v1173 = vunpack.c.l.b16 %v349
        %v1174 = vunpack.c.l.b16 %v350
        %v1175 = vunpack.c.l.b16 %v351
        %v1176 = vunpack.c.l.b16 %v352
        %v1177 = vunpack.c.l.b16 %v353
        %v1178 = vunpack.c.l.b16 %v354
        %v1179 = vunpack.c.l.b16 %v355
        %v1180 = vunpack.c.l.b16 %v356
        %v1181 = vunpack.c.l.b16 %v357
        %v1182 = vunpack.c.l.b16 %v358
        %v1183 = vunpack.c.l.b16 %v359
        %v1184 = vunpack.c.l.b16 %v360
        %v1185 = vunpack.c.l.b16 %v361
        %v1186 = vunpack.c.l.b16 %v362
        %v1187 = vunpack.c.l.b16 %v363
        %v1188 = vunpack.c.l.b16 %v364
        %v1189 = vunpack.c.l.b16 %v365
        %v1190 = vunpack.c.l.b16 %v366
        %v1191 = vunpack.c.l.b16 %v367
        %v1192 = vunpack.c.l.b16 %v368
        %v1193 = vunpack.c.l.b16 %v369
        %v1194 = vunpack.c.l.b16 %v370
        %v1195 = vunpack.c.l.b16 %v371
        %v1196 = vunpack.c.l.b16 %v372
        %v1197 = vunpack.c.l.b16 %v373
        %v1198 = vunpack.c.l.b16 %v374
        %v1199 = vunpack.c.l.b16 %v375
        %v1200 = vunpack.c.l.b16 %v376
        %v1201 = vunpack.c.l.b16 %v377
        %v1202 = vunpack.c.l.b16 %v378
        %v1203 = vunpack.c.l.b16 %v379
        %v1204 = vunpack.c.l.b16 %v380
        %v1205 = vunpack.c.l.b16 %v381
        %v1206 = vunpack.c.l.b16 %v382
        %v1207 = vunpack.c.l.b16 %v383
        %v1208 = vunpack.c.l.b16 %v384
        %v1209 = vunpack.c.l.b16 %v385
        %v1210 = vunpack.c.l.b16 %v386
        %v1211 = vunpack.c.l.b16 %v387
        %v1212 = vunpack.c.l.b16 %v388
        %v1213 = vunpack.c.l.b16 %v389
        %v1214 = vunpack.c.l.b16 %v390
        %v1215 = vunpack.c.l.b16 %v391
        %v1216 = vunpack.c.l.b16 %v392
        %v1217 = vunpack.c.l.b16 %v393
        %v1218 = vunpack.c.l.b16 %v394
        %v1219 = vunpack.c.l.b16 %v395
        %v1220 = vunpack.c.l.b16 %v396
        %v1221 = vunpack.c.l.b16 %v397
        %v1222 = vunpack.c.l.b16 %v398
        %v1223 = vunpack.c.l.b16 %v399
        %v1224 = vunpack.c.l.b16 %v400
        %v1225 = vunpack.c.l.b16 %v401
        %v1226 = vunpack.c.l.b16 %v402
        %v1227 = vunpack.c.l.b16 %v403
        %v1228 = vunpack.c.l.b16 %v404
        %v1229 = vunpack.c.l.b16 %v405
        %v1230 = vunpack.c.l.b16 %v406
        %v1231 = vunpack.c.l.b16 %v407
        %v1232 = vunpack.c.l.b16 %v408
        %v1233 = vunpack.c.l.b16 %v409
        %v1234 = vunpack.c.l.b16 %v410
        %v1235 = vunpack.c.l.b16 %v411
        %v1236 = vunpack.c.l.b16 %v412
        %v1237 = vunpack.c.l.b16 %v413
        %v1238 = vunpack.c.l.b16 %v414
        %v1239 = vunpack.c.l.b16 %v415
        %v1240 = vunpack.c.l.b16 %v416
        %v1241 = vunpack.c.l.b16 %v417
        %v1242 = vunpack.c.l.b16 %v418
        %v1243 = vunpack.c.l.b16 %v419
        %v1244 = vunpack.c.l.b16 %v420
        %v1245 = vunpack.c.l.b16 %v421
        %v1246 = vunpack.c.l.b16 %v422
        %v1247 = vunpack.c.l.b16 %v423
        %v1248 = vunpack.c.l.b16 %v424
        %v1249 = vunpack.c.l.b16 %v425
        %v1250 = vunpack.c.l.b16 %v426
        %v1251 = vunpack.c.l.b16 %v427
        %v1252 = vunpack.c.l.b16 %v428
        %v1253 = vunpack.c.l.b16 %v429
        %v1254 = vunpack.c.l.b16 %v430
        %v1255 = vunpack.c.l.b16 %v431
        %v1256 = vunpack.c.l.b16 %v432
        %v1257 = vunpack.c.l.b16 %v433
        %v1258 = vunpack.c.l.b16 %v434
        %v1259 = vunpack.c.l.b16 %v435
        %v1260 = vunpack.c.l.b16 %v436
        %v1261 = vunpack.c.l.b16 %v437
        %v1262 = vunpack.c.l.b16 %v438
        %v1263 = vunpack.c.l.b16 %v439
        %v1264 = vunpack.c.l.b16 %v440
        %v1265 = vunpack.c.l.b16 %v441
        %v1266 = vunpack.c.l.b16 %v442
        %v1267 = vunpack.c.l.b16 %v443
        %v1268 = vunpack.c.l.b16 %v444
        %v1269 = vunpack.c.l.b16 %v445
        %v1270 = vunpack.c.l.b16 %v446
        %v1271 = vunpack.c.l.b16 %v447
        %v1272 = vunpack.c.l.b16 %v448
        %v1273 = vunpack.c.l.b16 %v449
        %v1274 = vunpack.c.l.b16 %v450
        %v1275 = vunpack.c.l.b16 %v451
        %v1276 = vunpack.c.l.b16 %v452
        %v1277 = vunpack.c.l.b16 %v453
        %v1278 = vunpack.c.l.b16 %v454
        %v1279 = vunpack.c.l.b16 %v455
        %v1280 = vunpack.c.l.b16 %v456
        %v1281 = vunpack.c.l.b16 %v457
        %v1282 = vunpack.c.l.b16 %v458
        %v1283 = vunpack.c.l.b16 %v459
        %v1284 = vunpack.c.l.b16 %v460
        %v1285 = vunpack.c.l.b16 %v461
        %v1286 = vunpack.c.l.b16 %v462
        %v1287 = vunpack.c.l.b16 %v463
        %v1288 = vunpack.c.l.b16 %v464
        %v1289 = vunpack.c.l.b16 %v465
        %v1290 = vunpack.c.l.b16 %v466
        %v1291 = vunpack.c.l.b16 %v467
        %v1292 = vunpack.c.l.b16 %v468
        %v1293 = vunpack.c.l.b16 %v469
        %v1294 = vunpack.c.l.b16 %v470
        %v1295 = vunpack.c.l.b16 %v471
        %v1296 = vunpack.c.l.b16 %v472
        %v1297 = vunpack.c.l.b16 %v473
        %v1298 = vunpack.c.l.b16 %v474
        %v1299 = vunpack.c.l.b16 %v475
        %v1300 = vunpack.c.l.b16 %v476
        %v1301 = vunpack.c.l.b16 %v477
        %v1302 = vunpack.c.l.b16 %v478
        %v1303 = vunpack.c.l.b16 %v479
        %v1304 = vunpack.c.l.b16 %v480
        %v1305 = vunpack.c.l.b16 %v481
        %v1306 = vunpack.c.l.b16 %v482
        %v1307 = vunpack.c.l.b16 %v483
        %v1308 = vunpack.c.l.b16 %v484
        %v1309 = vunpack.c.l.b16 %v485
        %v1310 = vunpack.c.l.b16 %v486
        %v1311 = vunpack.c.l.b16 %v487
        %v1312 = vunpack.c.l.b16 %v488
        %v1313 = vunpack.c.l.b16 %v489
        %v1314 = vunpack.c.l.b16 %v490
        %v1315 = vunpack.c.l.b16 %v491
        %v1316 = vunpack.c.l.b16 %v492
        %v1317 = vunpack.c.l.b16 %v493
        %v1318 = vunpack.c.l.b16 %v494
        %v1319 = vunpack.c.l.b16 %v495
        %v1320 = vunpack.c.l.b16 %v496
        %v1321 = vunpack.c.l.b16 %v497
        %v1322 = vunpack.c.l.b16 %v498
        %v1323 = vunpack.c.l.b16 %v499
        %v1324 = vunpack.c.l.b16 %v500
        %v1325 = vunpack.c.l.b16 %v501
        %v1326 = vunpack.c.l.b16 %v502
        %v1327 = vunpack.c.l.b16 %v503
        %v1328 = vunpack.c.l.b16 %v504
        %v1329 = vunpack.c.l.b16 %v505
        %v1330 = vunpack.c.l.b16 %v506
        %v1331 = vunpack.c.l.b16 %v507
        %v1332 = vunpack.c.l.b16 %v508
        %v1333 = vunpack.c.l.b16 %v509
        %v1334 = vunpack.c.l.b16 %v510
        %v1335 = vunpack.c.l.b16 %v511
        %v1336 = vunpack.c.l.b16 %v512
        %v1337 = vunpack.c.l.b16 %v513
        %v1338 = vunpack.c.l.b16 %v514
        %v1339 = vunpack.c.l.b16 %v515
        %v1340 = vunpack.c.l.b16 %v516
        %v1341 = vunpack.c.l.b16 %v517
        %v1342 = vunpack.c.l.b16 %v518
        %v1343 = vunpack.c.l.b16 %v519
        %v1344 = vunpack.c.l.b16 %v520
        %v1345 = vunpack.c.l.b16 %v521
        %v1346 = vunpack.c.l.b16 %v522
        %v1347 = vunpack.c.l.b16 %v523
        %v1348 = vunpack.c.l.b16 %v524
        %v1349 = vunpack.c.l.b16 %v525
        %v1350 = vunpack.c.l.b16 %v526
        %v1351 = vunpack.c.l.b16 %v527
        %v1352 = vunpack.c.l.b16 %v528
        %v1353 = vunpack.c.l.b16 %v529
        %v1354 = vunpack.c.l.b16 %v530
        %v1355 = vunpack.c.l.b16 %v531
        %v1356 = vunpack.c.l.b16 %v532
        %v1357 = vunpack.c.l.b16 %v533
        %v1358 = vunpack.c.l.b16 %v534
        %v1359 = vunpack.c.l.b16 %v535
        %v1360 = vunpack.c.l.b16 %v536
        %v1361 = vunpack.c.l.b16 %v537
        %v1362 = vunpack.c.l.b16 %v538
        %v1363 = vunpack.c.l.b16 %v539
        %v1364 = vunpack.c.l.b16 %v540
        %v1365 = vunpack.c.l.b16 %v541
        %v1366 = vunpack.c.l.b16 %v542
        %v1367 = vunpack.c.l.b16 %v543
        %v1368 = vunpack.c.l.b16 %v544
        %v1369 = vunpack.c.l.b16 %v545
        %v1370 = vunpack.c.l.b16 %v546
        %v1371 = vunpack.c.l.b16 %v547
        %v1372 = vunpack.c.l.b16 %v548
        %v1373 = vunpack.c.l.b16 %v549
        %v1374 = vunpack.c.l.b16 %v550
        %v1375 = vunpack.c.l.b16 %v551
        %v1376 = vunpack.c.l.b16 %v552
        %v1377 = vunpack.c.l.b16 %v553
        %v1378 = vunpack.c.l.b16 %v554
        %v1379 = vunpack.c.l.b16 %v555
        %v1380 = vunpack.c.l.b16 %v556
        %v1381 = vunpack.c.l.b16 %v557
        %v1382 = vunpack.c.l.b16 %v558
        %v1383 = vunpack.c.l.b16 %v559
        %v1384 = vunpack.c.l.b16 %v560
        %v1385 = vunpack.c.l.b16 %v561
        %v1386 = vunpack.c.l.b16 %v562
        %v1387 = vunpack.c.l.b16 %v563
        %v1388 = vunpack.c.l.b16 %v564
        %v1389 = vunpack.c.l.b16 %v565
        %v1390 = vunpack.c.l.b16 %v566
        %v1391 = vunpack.c.l.b16 %v567
        %v1392 = vunpack.c.l.b16 %v568
        %v1393 = vunpack.c.l.b16 %v569
        %v1394 = vunpack.c.l.b16 %v570
        %v1395 = vunpack.c.l.b16 %v571
        %v1396 = vunpack.c.l.b16 %v572
        %v1397 = vunpack.c.l.b16 %v573
        %v1398 = vunpack.c.l.b16 %v574
        %v1399 = vunpack.c.l.b16 %v575
        %v1400 = vunpack.c.l.b16 %v576
        %v1401 = vunpack.c.l.b16 %v577
        %v1402 = vunpack.c.l.b16 %v578
        %v1403 = vunpack.c.l.b16 %v579
        %v1404 = vunpack.c.l.b16 %v580
        %v1405 = vunpack.c.l.b16 %v581
        %v1406 = vunpack.c.l.b16 %v582
        %v1407 = vunpack.c.l.b16 %v583
        %v1408 = vunpack.c.l.b16 %v584
        %v1409 = vunpack.c.l.b16 %v585
        %v1410 = vunpack.c.l.b16 %v586
        %v1411 = vunpack.c.l.b16 %v587
        %v1412 = vunpack.c.l.b16 %v588
        %v1413 = vunpack.c.l.b16 %v589
        %v1414 = vunpack.c.l.b16 %v590
        %v1415 = vunpack.c.l.b16 %v591
        %v1416 = vunpack.c.l.b16 %v592
        %v1417 = vunpack.c.l.b16 %v593
        %v1418 = vunpack.c.l.b16 %v594
        %v1419 = vunpack.c.l.b16 %v595
        %v1420 = vunpack.c.l.b16 %v596
        %v1421 = vunpack.c.l.b16 %v597
        %v1422 = vunpack.c.l.b16 %v598
        %v1423 = vunpack.c.l.b16 %v599
        %v1424 = vunpack.c.l.b16 %v600
        %v1425 = vunpack.c.l.b16 %v601
        %v1426 = vunpack.c.l.b16 %v602
        %v1427 = vunpack.c.l.b16 %v603
        %v1428 = vpack.c.b16 %v1061, %v1060
        %v1429 = vpack.c.b16 %v1063, %v1062
        %v1430 = vpack.c.b16 %v1065, %v1064
        %v1431 = vpack.c.b16 %v1067, %v1066
        %v1432 = vpack.c.b16 %v1069, %v1068
        %v1433 = vpack.c.b16 %v1071, %v1070
        %v1434 = vpack.c.b16 %v1073, %v1072
        %v1435 = vpack.c.b16 %v1075, %v1074
        %v1436 = vpack.c.b16 %v1077, %v1076
        %v1437 = vpack.c.b16 %v1079, %v1078
        %v1438 = vpack.c.b16 %v1081, %v1080
        %v1439 = vpack.c.b16 %v1083, %v1082
        %v1440 = vpack.c.b16 %v1085, %v1084
        %v1441 = vpack.c.b16 %v1087, %v1086
        %v1442 = vpack.c.b16 %v1089, %v1088
        %v1443 = vpack.c.b16 %v1091, %v1090
        %v1444 = vpack.c.b16 %v1093, %v1092
        %v1445 = vpack.c.b16 %v1095, %v1094
        %v1446 = vpack.c.b16 %v1097, %v1096
        %v1447 = vpack.c.b16 %v1099, %v1098
        %v1448 = vpack.c.b16 %v1101, %v1100
        %v1449 = vpack.c.b16 %v1103, %v1102
        %v1450 = vpack.c.b16 %v1105, %v1104
        %v1451 = vpack.c.b16 %v1107, %v1106
        %v1452 = vpack.c.b16 %v1109, %v1108
        %v1453 = vpack.c.b16 %v1111, %v1110
        %v1454 = vpack.c.b16 %v1113, %v1112
        %v1455 = vpack.c.b16 %v1115, %v1114
        %v1456 = vpack.c.b16 %v1117, %v1116
        %v1457 = vpack.c.b16 %v1119, %v1118
        %v1458 = vpack.c.b16 %v1121, %v1120
        %v1459 = vpack.c.b16 %v1123, %v1122
        %v1460 = vpack.c.b16 %v1125, %v1124
        %v1461 = vpack.c.b16 %v1127, %v1126
        %v1462 = vpack.c.b16 %v1129, %v1128
        %v1463 = vpack.c.b16 %v1131, %v1130
        %v1464 = vpack.c.b16 %v1133, %v1132
        %v1465 = vpack.c.b16 %v1135, %v1134
        %v1466 = vpack.c.b16 %v1137, %v1136
        %v1467 = vpack.c.b16 %v1139, %v1138
        %v1468 = vpack.c.b16 %v1141, %v1140
        %v1469 = vpack.c.b16 %v1143, %v1142
        %v1470 = vpack.c.b16 %v1145, %v1144
        %v1471 = vpack.c.b16 %v1147, %v1146
        %v1472 = vpack.c.b16 %v1149, %v1148
        %v1473 = vpack.c.b16 %v1151, %v1150
        %v1474 = vpack.c.b16 %v1153, %v1152
        %v1475 = vpack.c.b16 %v1155, %v1154
        %v1476 = vpack.c.b16 %v1157, %v1156
        %v1477 = vpack.c.b16 %v1159, %v1158
        %v1478 = vpack.c.b16 %v1161, %v1160
        %v1479 = vpack.c.b16 %v1163, %v1162
        %v1480 = vpack.c.b16 %v1165, %v1164
        %v1481 = vpack.c.b16 %v1167, %v1166
        %v1482 = vpack.c.b16 %v1169, %v1168
        %v1483 = vpack.c.b16 %v1171, %v1170
        %v1484 = vpack.c.b16 %v1173, %v1172
        %v1485 = vpack.c.b16 %v1175, %v1174
        %v1486 = vpack.c.b16 %v1177, %v1176
        %v1487 = vpack.c.b16 %v1179, %v1178
        %v1488 = vpack.c.b16 %v1181, %v1180
        %v1489 = vpack.c.b16 %v1183, %v1182
        %v1490 = vpack.c.b16 %v1185, %v1184
        %v1491 = vpack.c.b16 %v1187, %v1186
        %v1492 = vpack.c.b16 %v1189, %v1188
        %v1493 = vpack.c.b16 %v1191, %v1190
        %v1494 = vpack.c.b16 %v1193, %v1192
        %v1495 = vpack.c.b16 %v1195, %v1194
        %v1496 = vpack.c.b16 %v1197, %v1196
        %v1497 = vpack.c.b16 %v1199, %v1198
        %v1498 = vpack.c.b16 %v1201, %v1200
        %v1499 = vpack.c.b16 %v1203, %v1202
        %v1500 = vpack.c.b16 %v1205, %v1204
        %v1501 = vpack.c.b16 %v1207, %v1206
        %v1502 = vpack.c.b16 %v1209, %v1208
        %v1503 = vpack.c.b16 %v1211, %v1210
        %v1504 = vpack.c.b16 %v1213, %v1212
        %v1505 = vpack.c.b16 %v1215, %v1214
        %v1506 = vpack.c.b16 %v1217, %v1216
        %v1507 = vpack.c.b16 %v1219, %v1218
        %v1508 = vpack.c.b16 %v1221, %v1220
        %v1509 = vpack.c.b16 %v1223, %v1222
        %v1510 = vpack.c.b16 %v1225, %v1224
        %v1511 = vpack.c.b16 %v1227, %v1226
        %v1512 = vpack.c.b16 %v1229, %v1228
        %v1513 = vpack.c.b16 %v1231, %v1230
        %v1514 = vpack.c.b16 %v1233, %v1232
        %v1515 = vpack.c.b16 %v1235, %v1234
        %v1516 = vpack.c.b16 %v1237, %v1236
        %v1517 = vpack.c.b16 %v1239, %v1238
        %v1518 = vpack.c.b16 %v1241, %v1240
        %v1519 = vpack.c.b16 %v1243, %v1242
        %v1520 = vpack.c.b16 %v1245, %v1244
        %v1521 = vpack.c.b16 %v1247, %v1246
        %v1522 = vpack.c.b16 %v1249, %v1248
        %v1523 = vpack.c.b16 %v1251, %v1250
        %v1524 = vpack.c.b16 %v1253, %v1252
        %v1525 = vpack.c.b16 %v1255, %v1254
        %v1526 = vpack.c.b16 %v1257, %v1256
        %v1527 = vpack.c.b16 %v1259, %v1258
        %v1528 = vpack.c.b16 %v1261, %v1260
        %v1529 = vpack.c.b16 %v1263, %v1262
        %v1530 = vpack.c.b16 %v1265, %v1264
        %v1531 = vpack.c.b16 %v1267, %v1266
        %v1532 = vpack.c.b16 %v1269, %v1268
        %v1533 = vpack.c.b16 %v1271, %v1270
        %v1534 = vpack.c.b16 %v1273, %v1272
        %v1535 = vpack.c.b16 %v1275, %v1274
        %v1536 = vpack.c.b16 %v1277, %v1276
        %v1537 = vpack.c.b16 %v1279, %v1278
        %v1538 = vpack.c.b16 %v1281, %v1280
        %v1539 = vpack.c.b16 %v1283, %v1282
        %v1540 = vpack.c.b16 %v1285, %v1284
        %v1541 = vpack.c.b16 %v1287, %v1286
        %v1542 = vpack.c.b16 %v1289, %v1288
        %v1543 = vpack.c.b16 %v1291, %v1290
        %v1544 = vpack.c.b16 %v1293, %v1292
        %v1545 = vpack.c.b16 %v1295, %v1294
        %v1546 = vpack.c.b16 %v1297, %v1296
        %v1547 = vpack.c.b16 %v1299, %v1298
        %v1548 = vpack.c.b16 %v1301, %v1300
        %v1549 = vpack.c.b16 %v1303, %v1302
        %v1550 = vpack.c.b16 %v1305, %v1304
        %v1551 = vpack.c.b16 %v1307, %v1306
        %v1552 = vpack.c.b16 %v1309, %v1308
        %v1553 = vpack.c.b16 %v1311, %v1310
        %v1554 = vpack.c.b16 %v1313, %v1312
        %v1555 = vpack.c.b16 %v1315, %v1314
        %v1556 = vpack.c.b16 %v1317, %v1316
        %v1557 = vpack.c.b16 %v1319, %v1318
        %v1558 = vpack.c.b16 %v1321, %v1320
        %v1559 = vpack.c.b16 %v1323, %v1322
        %v1560 = vpack.c.b16 %v1325, %v1324
        %v1561 = vpack.c.b16 %v1327, %v1326
        %v1562 = vpack.c.b16 %v1329, %v1328
        %v1563 = vpack.c.b16 %v1331, %v1330
        %v1564 = vpack.c.b16 %v1333, %v1332
        %v1565 = vpack.c.b16 %v1335, %v1334
        %v1566 = vpack.c.b16 %v1337, %v1336
        %v1567 = vpack.c.b16 %v1339, %v1338
        %v1568 = vpack.c.b16 %v1341, %v1340
        %v1569 = vpack.c.b16 %v1343, %v1342
        %v1570 = vpack.c.b16 %v1345, %v1344
        %v1571 = vpack.c.b16 %v1347, %v1346
        %v1572 = vpack.c.b16 %v1349, %v1348
        %v1573 = vpack.c.b16 %v1351, %v1350
        %v1574 = vpack.c.b16 %v1353, %v1352
        %v1575 = vpack.c.b16 %v1355, %v1354
        %v1576 = vpack.c.b16 %v1357, %v1356
        %v1577 = vpack.c.b16 %v1359, %v1358
        %v1578 = vpack.c.b16 %v1361, %v1360
        %v1579 = vpack.c.b16 %v1363, %v1362
        %v1580 = vpack.c.b16 %v1365, %v1364
        %v1581 = vpack.c.b16 %v1367, %v1366
        %v1582 = vpack.c.b16 %v1369, %v1368
        %v1583 = vpack.c.b16 %v1371, %v1370
        %v1584 = vpack.c.b16 %v1373, %v1372
        %v1585 = vpack.c.b16 %v1375, %v1374
        %v1586 = vpack.c.b16 %v1377, %v1376
        %v1587 = vpack.c.b16 %v1379, %v1378
        %v1588 = vpack.c.b16 %v1381, %v1380
        %v1589 = vpack.c.b16 %v1383, %v1382
        %v1590 = vpack.c.b16 %v1385, %v1384
        %v1591 = vpack.c.b16 %v1387, %v1386
        %v1592 = vpack.c.b16 %v1389, %v1388
        %v1593 = vpack.c.b16 %v1391, %v1390
        %v1594 = vpack.c.b16 %v1393, %v1392
        %v1595 = vpack.c.b16 %v1395, %v1394
        %v1596 = vpack.c.b16 %v1397, %v1396
        %v1597 = vpack.c.b16 %v1399, %v1398
        %v1598 = vpack.c.b16 %v1401, %v1400
        %v1599 = vpack.c.b16 %v1403, %v1402
        %v1600 = vpack.c.b16 %v1405, %v1404
        %v1601 = vpack.c.b16 %v1407, %v1406
        %v1602 = vpack.c.b16 %v1409, %v1408
        %v1603 = vpack.c.b16 %v1411, %v1410
        %v1604 = vpack.c.b16 %v1413, %v1412
        %v1605 = vpack.c.b16 %v1415, %v1414
        %v1606 = vpack.c.b16 %v1417, %v1416
        %v1607 = vpack.c.b16 %v1419, %v1418
        %v1608 = vpack.c.b16 %v1421, %v1420
        %v1609 = vpack.c.b16 %v1423, %v1422
        %v1610 = vpack.c.b16 %v1425, %v1424
        %v1611 = vpack.c.b16 %v1427, %v1426
        %1796 = vmatprep.subr.bf16.mxu0 0
        %1797 = vmatpush1.bf16.msra.mxu0 %v1435
        %1798 = vmatprep.subr.bf16.mxu0 0
        %1799 = vmatpush1.bf16.msra.mxu0 %v1434
        %1800 = vmatprep.subr.bf16.mxu0 0
        %1801 = vmatpush1.bf16.msra.mxu0 %v1433
        %1802 = vmatprep.subr.bf16.mxu0 0
        %1803 = vmatpush1.bf16.msra.mxu0 %v1432
        %1804 = vmatprep.subr.bf16.mxu0 0
        %1805 = vmatpush1.bf16.msra.mxu0 %v1431
        %1806 = vmatprep.subr.bf16.mxu0 0
        %1807 = vmatpush1.bf16.msra.mxu0 %v1430
        %1808 = vmatprep.subr.bf16.mxu0 0
        %1809 = vmatpush1.bf16.msra.mxu0 %v1429
        %1810 = vmatprep.subr.bf16.mxu0 0
        %1811 = vmatpush1.bf16.msra.mxu0 %v1428
        %1812 = vmatprep.subr.bf16.mxu0 0
        %1813 = vmatpush2.bf16.msra.mxu0 %v1443
        %1814 = vmatprep.subr.bf16.mxu0 0
        %1815 = vmatpush2.bf16.msra.mxu0 %v1442
        %1816 = vmatprep.subr.bf16.mxu0 0
        %1817 = vmatpush2.bf16.msra.mxu0 %v1441
        %1818 = vmatprep.subr.bf16.mxu0 0
        %1819 = vmatpush2.bf16.msra.mxu0 %v1440
        %1820 = vmatprep.subr.bf16.mxu0 0
        %1821 = vmatpush2.bf16.msra.mxu0 %v1439
        %1822 = vmatprep.subr.bf16.mxu0 0
        %1823 = vmatpush2.bf16.msra.mxu0 %v1438
        %1824 = vmatprep.subr.bf16.mxu0 0
        %1825 = vmatpush2.bf16.msra.mxu0 %v1437
        %1826 = vmatprep.subr.bf16.mxu0 0
        %1827 = vmatpush2.bf16.msra.mxu0 %v1436
        %1828 = vmatprep.mubr.bf16.mxu0 %v647
        %1829 = vmatmul.mubr.bf16.gmra.mxu0 %v646
        %v1830 = vpop.f32.mrf.mxu0
        %v1831 = vadd.f32 %v609, %v1830
        %v1832 = vpop.f32.mrf.mxu0
        %v1833 = vpop.f32.mrf.mxu0
        %v1834 = vpop.f32.mrf.mxu0
        %1835 = vdwg.mxu0
        %1836 = vmatprep.subr.bf16.mxu0 0
        %1837 = vmatpush1.bf16.msra.mxu0 %v1451
        %1838 = vmatprep.subr.bf16.mxu0 0
        %1839 = vmatpush1.bf16.msra.mxu0 %v1450
        %1840 = vmatprep.subr.bf16.mxu0 0
        %1841 = vmatpush1.bf16.msra.mxu0 %v1449
        %1842 = vmatprep.subr.bf16.mxu0 0
        %1843 = vmatpush1.bf16.msra.mxu0 %v1448
        %1844 = vmatprep.subr.bf16.mxu0 0
        %1845 = vmatpush1.bf16.msra.mxu0 %v1447
        %1846 = vmatprep.subr.bf16.mxu0 0
        %1847 = vmatpush1.bf16.msra.mxu0 %v1446
        %1848 = vmatprep.subr.bf16.mxu0 0
        %1849 = vmatpush1.bf16.msra.mxu0 %v1445
        %1850 = vmatprep.subr.bf16.mxu0 0
        %1851 = vmatpush1.bf16.msra.mxu0 %v1444
        %1852 = vmatprep.subr.bf16.mxu0 0
        %1853 = vmatpush2.bf16.msra.mxu0 %v1459
        %1854 = vmatprep.subr.bf16.mxu0 0
        %1855 = vmatpush2.bf16.msra.mxu0 %v1458
        %1856 = vmatprep.subr.bf16.mxu0 0
        %1857 = vmatpush2.bf16.msra.mxu0 %v1457
        %1858 = vmatprep.subr.bf16.mxu0 0
        %1859 = vmatpush2.bf16.msra.mxu0 %v1456
        %1860 = vmatprep.subr.bf16.mxu0 0
        %1861 = vmatpush2.bf16.msra.mxu0 %v1455
        %1862 = vmatprep.subr.bf16.mxu0 0
        %1863 = vmatpush2.bf16.msra.mxu0 %v1454
        %1864 = vmatprep.subr.bf16.mxu0 0
        %1865 = vmatpush2.bf16.msra.mxu0 %v1453
        %1866 = vmatprep.subr.bf16.mxu0 0
        %1867 = vmatpush2.bf16.msra.mxu0 %v1452
        %1868 = vmatprep.mubr.bf16.mxu0 %v649
        %1869 = vmatmul.mubr.bf16.gmra.mxu0 %v648
        %v1870 = vpop.f32.mrf.mxu0
        %v1871 = vadd.f32 %v1831, %v1870
        %v1872 = vpop.f32.mrf.mxu0
        %v1873 = vpop.f32.mrf.mxu0
        %v1874 = vpop.f32.mrf.mxu0
        %1875 = vdwg.mxu0
        %1876 = vmatprep.subr.bf16.mxu0 0
        %1877 = vmatpush1.bf16.msra.mxu0 %v1467
        %1878 = vmatprep.subr.bf16.mxu0 0
        %1879 = vmatpush1.bf16.msra.mxu0 %v1466
        %1880 = vmatprep.subr.bf16.mxu0 0
        %1881 = vmatpush1.bf16.msra.mxu0 %v1465
        %1882 = vmatprep.subr.bf16.mxu0 0
        %1883 = vmatpush1.bf16.msra.mxu0 %v1464
        %1884 = vmatprep.subr.bf16.mxu0 0
        %1885 = vmatpush1.bf16.msra.mxu0 %v1463
        %1886 = vmatprep.subr.bf16.mxu0 0
        %1887 = vmatpush1.bf16.msra.mxu0 %v1462
        %1888 = vmatprep.subr.bf16.mxu0 0
        %1889 = vmatpush1.bf16.msra.mxu0 %v1461
        %1890 = vmatprep.subr.bf16.mxu0 0
        %1891 = vmatpush1.bf16.msra.mxu0 %v1460
        %1892 = vmatprep.subr.bf16.mxu0 0
        %1893 = vmatpush2.bf16.msra.mxu0 %v1475
        %1894 = vmatprep.subr.bf16.mxu0 0
        %1895 = vmatpush2.bf16.msra.mxu0 %v1474
        %1896 = vmatprep.subr.bf16.mxu0 0
        %1897 = vmatpush2.bf16.msra.mxu0 %v1473
        %1898 = vmatprep.subr.bf16.mxu0 0
        %1899 = vmatpush2.bf16.msra.mxu0 %v1472
        %1900 = vmatprep.subr.bf16.mxu0 0
        %1901 = vmatpush2.bf16.msra.mxu0 %v1471
        %1902 = vmatprep.subr.bf16.mxu0 0
        %1903 = vmatpush2.bf16.msra.mxu0 %v1470
        %1904 = vmatprep.subr.bf16.mxu0 0
        %1905 = vmatpush2.bf16.msra.mxu0 %v1469
        %1906 = vmatprep.subr.bf16.mxu0 0
        %1907 = vmatpush2.bf16.msra.mxu0 %v1468
        %1908 = vmatprep.mubr.bf16.mxu0 %v651
        %1909 = vmatmul.mubr.bf16.gmra.mxu0 %v650
        %v1910 = vpop.f32.mrf.mxu0
        %v1911 = vadd.f32 %v1871, %v1910
        %v1912 = vpop.f32.mrf.mxu0
        %v1913 = vpop.f32.mrf.mxu0
        %v1914 = vpop.f32.mrf.mxu0
        %1915 = vdwg.mxu0
        %1916 = vmatprep.subr.bf16.mxu0 0
        %1917 = vmatpush1.bf16.msra.mxu0 %v1483
        %1918 = vmatprep.subr.bf16.mxu0 0
        %1919 = vmatpush1.bf16.msra.mxu0 %v1482
        %1920 = vmatprep.subr.bf16.mxu0 0
        %1921 = vmatpush1.bf16.msra.mxu0 %v1481
        %1922 = vmatprep.subr.bf16.mxu0 0
        %1923 = vmatpush1.bf16.msra.mxu0 %v1480
        %1924 = vmatprep.subr.bf16.mxu0 0
        %1925 = vmatpush1.bf16.msra.mxu0 %v1479
        %1926 = vmatprep.subr.bf16.mxu0 0
        %1927 = vmatpush1.bf16.msra.mxu0 %v1478
        %1928 = vmatprep.subr.bf16.mxu0 0
        %1929 = vmatpush1.bf16.msra.mxu0 %v1477
        %1930 = vmatprep.subr.bf16.mxu0 0
        %1931 = vmatpush1.bf16.msra.mxu0 %v1476
        %1932 = vmatprep.subr.bf16.mxu0 0
        %1933 = vmatpush2.bf16.msra.mxu0 %v1491
        %1934 = vmatprep.subr.bf16.mxu0 0
        %1935 = vmatpush2.bf16.msra.mxu0 %v1490
        %1936 = vmatprep.subr.bf16.mxu0 0
        %1937 = vmatpush2.bf16.msra.mxu0 %v1489
        %1938 = vmatprep.subr.bf16.mxu0 0
        %1939 = vmatpush2.bf16.msra.mxu0 %v1488
        %1940 = vmatprep.subr.bf16.mxu0 0
        %1941 = vmatpush2.bf16.msra.mxu0 %v1487
        %1942 = vmatprep.subr.bf16.mxu0 0
        %1943 = vmatpush2.bf16.msra.mxu0 %v1486
        %1944 = vmatprep.subr.bf16.mxu0 0
        %1945 = vmatpush2.bf16.msra.mxu0 %v1485
        %1946 = vmatprep.subr.bf16.mxu0 0
        %1947 = vmatpush2.bf16.msra.mxu0 %v1484
        %1948 = vmatprep.mubr.bf16.mxu0 %v653
        %1949 = vmatmul.mubr.bf16.gmra.mxu0 %v652
        %v1950 = vpop.f32.mrf.mxu0
        %v1951 = vadd.f32 %v1911, %v1950
        %v1952 = vpop.f32.mrf.mxu0
        %v1953 = vpop.f32.mrf.mxu0
        %v1954 = vpop.f32.mrf.mxu0
        %1955 = vdwg.mxu0
        %1956 = vmatprep.subr.bf16.mxu0 0
        %1957 = vmatpush1.bf16.msra.mxu0 %v1499
        %1958 = vmatprep.subr.bf16.mxu0 0
        %1959 = vmatpush1.bf16.msra.mxu0 %v1498
        %1960 = vmatprep.subr.bf16.mxu0 0
        %1961 = vmatpush1.bf16.msra.mxu0 %v1497
        %1962 = vmatprep.subr.bf16.mxu0 0
        %1963 = vmatpush1.bf16.msra.mxu0 %v1496
        %1964 = vmatprep.subr.bf16.mxu0 0
        %1965 = vmatpush1.bf16.msra.mxu0 %v1495
        %1966 = vmatprep.subr.bf16.mxu0 0
        %1967 = vmatpush1.bf16.msra.mxu0 %v1494
        %1968 = vmatprep.subr.bf16.mxu0 0
        %1969 = vmatpush1.bf16.msra.mxu0 %v1493
        %1970 = vmatprep.subr.bf16.mxu0 0
        %1971 = vmatpush1.bf16.msra.mxu0 %v1492
        %1972 = vmatprep.subr.bf16.mxu0 0
        %1973 = vmatpush2.bf16.msra.mxu0 %v1507
        %1974 = vmatprep.subr.bf16.mxu0 0
        %1975 = vmatpush2.bf16.msra.mxu0 %v1506
        %1976 = vmatprep.subr.bf16.mxu0 0
        %1977 = vmatpush2.bf16.msra.mxu0 %v1505
        %1978 = vmatprep.subr.bf16.mxu0 0
        %1979 = vmatpush2.bf16.msra.mxu0 %v1504
        %1980 = vmatprep.subr.bf16.mxu0 0
        %1981 = vmatpush2.bf16.msra.mxu0 %v1503
        %1982 = vmatprep.subr.bf16.mxu0 0
        %1983 = vmatpush2.bf16.msra.mxu0 %v1502
        %1984 = vmatprep.subr.bf16.mxu0 0
        %1985 = vmatpush2.bf16.msra.mxu0 %v1501
        %1986 = vmatprep.subr.bf16.mxu0 0
        %1987 = vmatpush2.bf16.msra.mxu0 %v1500
        %1988 = vmatprep.mubr.bf16.mxu0 %v655
        %1989 = vmatmul.mubr.bf16.gmra.mxu0 %v654
        %v1990 = vpop.f32.mrf.mxu0
        %v1991 = vadd.f32 %v1951, %v1990
        %v1992 = vpop.f32.mrf.mxu0
        %v1993 = vpop.f32.mrf.mxu0
        %v1994 = vpop.f32.mrf.mxu0
        %1995 = vdwg.mxu0
        %1996 = vmatprep.subr.bf16.mxu0 0
        %1997 = vmatpush1.bf16.msra.mxu0 %v1515
        %1998 = vmatprep.subr.bf16.mxu0 0
        %1999 = vmatpush1.bf16.msra.mxu0 %v1514
        %2000 = vmatprep.subr.bf16.mxu0 0
        %2001 = vmatpush1.bf16.msra.mxu0 %v1513
        %2002 = vmatprep.subr.bf16.mxu0 0
        %2003 = vmatpush1.bf16.msra.mxu0 %v1512
        %2004 = vmatprep.subr.bf16.mxu0 0
        %2005 = vmatpush1.bf16.msra.mxu0 %v1511
        %2006 = vmatprep.subr.bf16.mxu0 0
        %2007 = vmatpush1.bf16.msra.mxu0 %v1510
        %2008 = vmatprep.subr.bf16.mxu0 0
        %2009 = vmatpush1.bf16.msra.mxu0 %v1509
        %2010 = vmatprep.subr.bf16.mxu0 0
        %2011 = vmatpush1.bf16.msra.mxu0 %v1508
        %2012 = vmatprep.subr.bf16.mxu0 0
        %2013 = vmatpush2.bf16.msra.mxu0 %v1523
        %2014 = vmatprep.subr.bf16.mxu0 0
        %2015 = vmatpush2.bf16.msra.mxu0 %v1522
        %2016 = vmatprep.subr.bf16.mxu0 0
        %2017 = vmatpush2.bf16.msra.mxu0 %v1521
        %2018 = vmatprep.subr.bf16.mxu0 0
        %2019 = vmatpush2.bf16.msra.mxu0 %v1520
        %2020 = vmatprep.subr.bf16.mxu0 0
        %2021 = vmatpush2.bf16.msra.mxu0 %v1519
        %2022 = vmatprep.subr.bf16.mxu0 0
        %2023 = vmatpush2.bf16.msra.mxu0 %v1518
        %2024 = vmatprep.subr.bf16.mxu0 0
        %2025 = vmatpush2.bf16.msra.mxu0 %v1517
        %2026 = vmatprep.subr.bf16.mxu0 0
        %2027 = vmatpush2.bf16.msra.mxu0 %v1516
        %2028 = vmatprep.mubr.bf16.mxu0 %v657
        %2029 = vmatmul.mubr.bf16.gmra.mxu0 %v656
        %v2030 = vpop.f32.mrf.mxu0
        %v2031 = vadd.f32 %v1991, %v2030
        %v2032 = vpop.f32.mrf.mxu0
        %v2033 = vpop.f32.mrf.mxu0
        %v2034 = vpop.f32.mrf.mxu0
        %2035 = vdwg.mxu0
        %2036 = vmatprep.subr.bf16.mxu0 0
        %2037 = vmatpush1.bf16.msra.mxu0 %v1531
        %2038 = vmatprep.subr.bf16.mxu0 0
        %2039 = vmatpush1.bf16.msra.mxu0 %v1530
        %2040 = vmatprep.subr.bf16.mxu0 0
        %2041 = vmatpush1.bf16.msra.mxu0 %v1529
        %2042 = vmatprep.subr.bf16.mxu0 0
        %2043 = vmatpush1.bf16.msra.mxu0 %v1528
        %2044 = vmatprep.subr.bf16.mxu0 0
        %2045 = vmatpush1.bf16.msra.mxu0 %v1527
        %2046 = vmatprep.subr.bf16.mxu0 0
        %2047 = vmatpush1.bf16.msra.mxu0 %v1526
        %2048 = vmatprep.subr.bf16.mxu0 0
        %2049 = vmatpush1.bf16.msra.mxu0 %v1525
        %2050 = vmatprep.subr.bf16.mxu0 0
        %2051 = vmatpush1.bf16.msra.mxu0 %v1524
        %2052 = vmatprep.subr.bf16.mxu0 0
        %2053 = vmatpush2.bf16.msra.mxu0 %v1539
        %2054 = vmatprep.subr.bf16.mxu0 0
        %2055 = vmatpush2.bf16.msra.mxu0 %v1538
        %2056 = vmatprep.subr.bf16.mxu0 0
        %2057 = vmatpush2.bf16.msra.mxu0 %v1537
        %2058 = vmatprep.subr.bf16.mxu0 0
        %2059 = vmatpush2.bf16.msra.mxu0 %v1536
        %2060 = vmatprep.subr.bf16.mxu0 0
        %2061 = vmatpush2.bf16.msra.mxu0 %v1535
        %2062 = vmatprep.subr.bf16.mxu0 0
        %2063 = vmatpush2.bf16.msra.mxu0 %v1534
        %2064 = vmatprep.subr.bf16.mxu0 0
        %2065 = vmatpush2.bf16.msra.mxu0 %v1533
        %2066 = vmatprep.subr.bf16.mxu0 0
        %2067 = vmatpush2.bf16.msra.mxu0 %v1532
        %2068 = vmatprep.mubr.bf16.mxu0 %v659
        %2069 = vmatmul.mubr.bf16.gmra.mxu0 %v658
        %v2070 = vpop.f32.mrf.mxu0
        %v2071 = vadd.f32 %v2031, %v2070
        %v2072 = vpop.f32.mrf.mxu0
        %v2073 = vpop.f32.mrf.mxu0
        %v2074 = vpop.f32.mrf.mxu0
        %2075 = vdwg.mxu0
        %2076 = vmatprep.subr.bf16.mxu0 0
        %2077 = vmatpush1.bf16.msra.mxu0 %v1547
        %2078 = vmatprep.subr.bf16.mxu0 0
        %2079 = vmatpush1.bf16.msra.mxu0 %v1546
        %2080 = vmatprep.subr.bf16.mxu0 0
        %2081 = vmatpush1.bf16.msra.mxu0 %v1545
        %2082 = vmatprep.subr.bf16.mxu0 0
        %2083 = vmatpush1.bf16.msra.mxu0 %v1544
        %2084 = vmatprep.subr.bf16.mxu0 0
        %2085 = vmatpush1.bf16.msra.mxu0 %v1543
        %2086 = vmatprep.subr.bf16.mxu0 0
        %2087 = vmatpush1.bf16.msra.mxu0 %v1542
        %2088 = vmatprep.subr.bf16.mxu0 0
        %2089 = vmatpush1.bf16.msra.mxu0 %v1541
        %2090 = vmatprep.subr.bf16.mxu0 0
        %2091 = vmatpush1.bf16.msra.mxu0 %v1540
        %2092 = vmatprep.subr.bf16.mxu0 0
        %2093 = vmatpush2.bf16.msra.mxu0 %v1555
        %2094 = vmatprep.subr.bf16.mxu0 0
        %2095 = vmatpush2.bf16.msra.mxu0 %v1554
        %2096 = vmatprep.subr.bf16.mxu0 0
        %2097 = vmatpush2.bf16.msra.mxu0 %v1553
        %2098 = vmatprep.subr.bf16.mxu0 0
        %2099 = vmatpush2.bf16.msra.mxu0 %v1552
        %2100 = vmatprep.subr.bf16.mxu0 0
        %2101 = vmatpush2.bf16.msra.mxu0 %v1551
        %2102 = vmatprep.subr.bf16.mxu0 0
        %2103 = vmatpush2.bf16.msra.mxu0 %v1550
        %2104 = vmatprep.subr.bf16.mxu0 0
        %2105 = vmatpush2.bf16.msra.mxu0 %v1549
        %2106 = vmatprep.subr.bf16.mxu0 0
        %2107 = vmatpush2.bf16.msra.mxu0 %v1548
        %2108 = vmatprep.mubr.bf16.mxu0 %v661
        %2109 = vmatmul.mubr.bf16.gmra.mxu0 %v660
        %v2110 = vpop.f32.mrf.mxu0
        %v2111 = vadd.f32 %v2071, %v2110
        %v2112 = vpop.f32.mrf.mxu0
        %v2113 = vpop.f32.mrf.mxu0
        %v2114 = vpop.f32.mrf.mxu0
        %2115 = vdwg.mxu0
        %2116 = vmatprep.subr.bf16.mxu0 0
        %2117 = vmatpush1.bf16.msra.mxu0 %v1563
        %2118 = vmatprep.subr.bf16.mxu0 0
        %2119 = vmatpush1.bf16.msra.mxu0 %v1562
        %2120 = vmatprep.subr.bf16.mxu0 0
        %2121 = vmatpush1.bf16.msra.mxu0 %v1561
        %2122 = vmatprep.subr.bf16.mxu0 0
        %2123 = vmatpush1.bf16.msra.mxu0 %v1560
        %2124 = vmatprep.subr.bf16.mxu0 0
        %2125 = vmatpush1.bf16.msra.mxu0 %v1559
        %2126 = vmatprep.subr.bf16.mxu0 0
        %2127 = vmatpush1.bf16.msra.mxu0 %v1558
        %2128 = vmatprep.subr.bf16.mxu0 0
        %2129 = vmatpush1.bf16.msra.mxu0 %v1557
        %2130 = vmatprep.subr.bf16.mxu0 0
        %2131 = vmatpush1.bf16.msra.mxu0 %v1556
        %2132 = vmatprep.subr.bf16.mxu0 0
        %2133 = vmatpush2.bf16.msra.mxu0 %v1571
        %2134 = vmatprep.subr.bf16.mxu0 0
        %2135 = vmatpush2.bf16.msra.mxu0 %v1570
        %2136 = vmatprep.subr.bf16.mxu0 0
        %2137 = vmatpush2.bf16.msra.mxu0 %v1569
        %2138 = vmatprep.subr.bf16.mxu0 0
        %2139 = vmatpush2.bf16.msra.mxu0 %v1568
        %2140 = vmatprep.subr.bf16.mxu0 0
        %2141 = vmatpush2.bf16.msra.mxu0 %v1567
        %2142 = vmatprep.subr.bf16.mxu0 0
        %2143 = vmatpush2.bf16.msra.mxu0 %v1566
        %2144 = vmatprep.subr.bf16.mxu0 0
        %2145 = vmatpush2.bf16.msra.mxu0 %v1565
        %2146 = vmatprep.subr.bf16.mxu0 0
        %2147 = vmatpush2.bf16.msra.mxu0 %v1564
        %2148 = vmatprep.mubr.bf16.mxu0 %v663
        %2149 = vmatmul.mubr.bf16.gmra.mxu0 %v662
        %v2150 = vpop.f32.mrf.mxu0
        %v2151 = vadd.f32 %v2111, %v2150
        %v2152 = vpop.f32.mrf.mxu0
        %v2153 = vpop.f32.mrf.mxu0
        %v2154 = vpop.f32.mrf.mxu0
        %2155 = vdwg.mxu0
        %2156 = vmatprep.subr.bf16.mxu0 0
        %2157 = vmatpush1.bf16.msra.mxu0 %v1579
        %2158 = vmatprep.subr.bf16.mxu0 0
        %2159 = vmatpush1.bf16.msra.mxu0 %v1578
        %2160 = vmatprep.subr.bf16.mxu0 0
        %2161 = vmatpush1.bf16.msra.mxu0 %v1577
        %2162 = vmatprep.subr.bf16.mxu0 0
        %2163 = vmatpush1.bf16.msra.mxu0 %v1576
        %2164 = vmatprep.subr.bf16.mxu0 0
        %2165 = vmatpush1.bf16.msra.mxu0 %v1575
        %2166 = vmatprep.subr.bf16.mxu0 0
        %2167 = vmatpush1.bf16.msra.mxu0 %v1574
        %2168 = vmatprep.subr.bf16.mxu0 0
        %2169 = vmatpush1.bf16.msra.mxu0 %v1573
        %2170 = vmatprep.subr.bf16.mxu0 0
        %2171 = vmatpush1.bf16.msra.mxu0 %v1572
        %2172 = vmatprep.subr.bf16.mxu0 0
        %2173 = vmatpush2.bf16.msra.mxu0 %v1587
        %2174 = vmatprep.subr.bf16.mxu0 0
        %2175 = vmatpush2.bf16.msra.mxu0 %v1586
        %2176 = vmatprep.subr.bf16.mxu0 0
        %2177 = vmatpush2.bf16.msra.mxu0 %v1585
        %2178 = vmatprep.subr.bf16.mxu0 0
        %2179 = vmatpush2.bf16.msra.mxu0 %v1584
        %2180 = vmatprep.subr.bf16.mxu0 0
        %2181 = vmatpush2.bf16.msra.mxu0 %v1583
        %2182 = vmatprep.subr.bf16.mxu0 0
        %2183 = vmatpush2.bf16.msra.mxu0 %v1582
        %2184 = vmatprep.subr.bf16.mxu0 0
        %2185 = vmatpush2.bf16.msra.mxu0 %v1581
        %2186 = vmatprep.subr.bf16.mxu0 0
        %2187 = vmatpush2.bf16.msra.mxu0 %v1580
        %2188 = vmatprep.mubr.bf16.mxu0 %v665
        %2189 = vmatmul.mubr.bf16.gmra.mxu0 %v664
        %v2190 = vpop.f32.mrf.mxu0
        %v2191 = vadd.f32 %v2151, %v2190
        %v2192 = vpop.f32.mrf.mxu0
        %v2193 = vpop.f32.mrf.mxu0
        %v2194 = vpop.f32.mrf.mxu0
        %2195 = vdwg.mxu0
        %2196 = vmatprep.subr.bf16.mxu0 0
        %2197 = vmatpush1.bf16.msra.mxu0 %v1595
        %2198 = vmatprep.subr.bf16.mxu0 0
        %2199 = vmatpush1.bf16.msra.mxu0 %v1594
        %2200 = vmatprep.subr.bf16.mxu0 0
        %2201 = vmatpush1.bf16.msra.mxu0 %v1593
        %2202 = vmatprep.subr.bf16.mxu0 0
        %2203 = vmatpush1.bf16.msra.mxu0 %v1592
        %2204 = vmatprep.subr.bf16.mxu0 0
        %2205 = vmatpush1.bf16.msra.mxu0 %v1591
        %2206 = vmatprep.subr.bf16.mxu0 0
        %2207 = vmatpush1.bf16.msra.mxu0 %v1590
        %2208 = vmatprep.subr.bf16.mxu0 0
        %2209 = vmatpush1.bf16.msra.mxu0 %v1589
        %2210 = vmatprep.subr.bf16.mxu0 0
        %2211 = vmatpush1.bf16.msra.mxu0 %v1588
        %2212 = vmatprep.subr.bf16.mxu0 0
        %2213 = vmatpush2.bf16.msra.mxu0 %v1603
        %2214 = vmatprep.subr.bf16.mxu0 0
        %2215 = vmatpush2.bf16.msra.mxu0 %v1602
        %2216 = vmatprep.subr.bf16.mxu0 0
        %2217 = vmatpush2.bf16.msra.mxu0 %v1601
        %2218 = vmatprep.subr.bf16.mxu0 0
        %2219 = vmatpush2.bf16.msra.mxu0 %v1600
        %2220 = vmatprep.subr.bf16.mxu0 0
        %2221 = vmatpush2.bf16.msra.mxu0 %v1599
        %2222 = vmatprep.subr.bf16.mxu0 0
        %2223 = vmatpush2.bf16.msra.mxu0 %v1598
        %2224 = vmatprep.subr.bf16.mxu0 0
        %2225 = vmatpush2.bf16.msra.mxu0 %v1597
        %2226 = vmatprep.subr.bf16.mxu0 0
        %2227 = vmatpush2.bf16.msra.mxu0 %v1596
        %2228 = vmatprep.mubr.bf16.mxu0 %v667
        %2229 = vmatmul.mubr.bf16.gmra.mxu0 %v666
        %v2230 = vpop.f32.mrf.mxu0
        %v2231 = vadd.f32 %v2191, %v2230
        %v2232 = vpop.f32.mrf.mxu0
        %v2233 = vpop.f32.mrf.mxu0
        %v2234 = vpop.f32.mrf.mxu0
        %2235 = vdwg.mxu0
        %2236 = vmatprep.subr.bf16.mxu0 0
        %2237 = vmatpush1.bf16.msra.mxu0 %v1611
        %2238 = vmatprep.subr.bf16.mxu0 0
        %2239 = vmatpush1.bf16.msra.mxu0 %v1610
        %2240 = vmatprep.subr.bf16.mxu0 0
        %2241 = vmatpush1.bf16.msra.mxu0 %v1609
        %2242 = vmatprep.subr.bf16.mxu0 0
        %2243 = vmatpush1.bf16.msra.mxu0 %v1608
        %2244 = vmatprep.subr.bf16.mxu0 0
        %2245 = vmatpush1.bf16.msra.mxu0 %v1607
        %2246 = vmatprep.subr.bf16.mxu0 0
        %2247 = vmatpush1.bf16.msra.mxu0 %v1606
        %2248 = vmatprep.subr.bf16.mxu0 0
        %2249 = vmatpush1.bf16.msra.mxu0 %v1605
        %2250 = vmatprep.subr.bf16.mxu0 0
        %2251 = vmatpush1.bf16.msra.mxu0 %v1604
        %2252 = vmatprep.subr.bf16.mxu0 0
        %2253 = vmatpush2.bf16.msra.mxu0 0
        %2254 = vmatprep.subr.bf16.mxu0 0
        %2255 = vmatpush2.bf16.msra.mxu0 0
        %2256 = vmatprep.subr.bf16.mxu0 0
        %2257 = vmatpush2.bf16.msra.mxu0 0
        %2258 = vmatprep.subr.bf16.mxu0 0
        %2259 = vmatpush2.bf16.msra.mxu0 0
        %2260 = vmatprep.subr.bf16.mxu0 0
        %2261 = vmatpush2.bf16.msra.mxu0 0
        %2262 = vmatprep.subr.bf16.mxu0 0
        %2263 = vmatpush2.bf16.msra.mxu0 0
        %2264 = vmatprep.subr.bf16.mxu0 0
        %2265 = vmatpush2.bf16.msra.mxu0 0
        %2266 = vmatprep.subr.bf16.mxu0 0
        %2267 = vmatpush2.bf16.msra.mxu0 0
        %2268 = vmatprep.mubr.bf16.mxu0 0
        %2269 = vmatmul.mubr.bf16.gmra.mxu0 %v668
        %v2270 = vpop.f32.mrf.mxu0
        %v2271 = vadd.f32 %v2231, %v2270
        %v2272 = vpop.f32.mrf.mxu0
        %v2273 = vpop.f32.mrf.mxu0
        %v2274 = vpop.f32.mrf.mxu0
        %2275 = vdwg.mxu0
        %v2276 = vmax.f32 %v2271, 0.0
        %v2277 = vpack.c.bf16 %v2276, %v2276
        %v2278 = vld [vmem:[%s3] sm:$0xf]
        %v2279 = vld [vmem:[%s3 + $0x4] sm:$0xf]
        %v2280 = vld [vmem:[%s3 + $0x8] sm:$0xf]
        %v2281 = vld [vmem:[%s3 + $0xc] sm:$0xf]
        %v2282 = vld [vmem:[%s4] sm:$0x1]
        %v2284 = vlaneseq
        %v2285 = vshrl.u32 %v2284, 7
        %v2286 = vsub.s32 0, %v2285
        %v2287 = vrot.slane %v2282, %v2286
        %v2293 = vunpack.c.l.b16 %v2278
        %v2294 = vunpack.c.l.b16 %v2279
        %v2295 = vunpack.c.l.b16 %v2280
        %v2296 = vunpack.c.l.b16 %v2281
        %v2297 = vpack.c.b16 %v2294, %v2293
        %v2298 = vpack.c.b16 %v2296, %v2295
        %vm2301 = vcmask 261120
        %v2303 = vsel %vm2301, %v2277, 0
        %2305 = vmatprep.subr.bf16.mxu0 0
        %2306 = vmatpush1.bf16.msra.mxu0 0
        %2307 = vmatprep.subr.bf16.mxu0 0
        %2308 = vmatpush1.bf16.msra.mxu0 0
        %2309 = vmatprep.subr.bf16.mxu0 0
        %2310 = vmatpush1.bf16.msra.mxu0 0
        %2311 = vmatprep.subr.bf16.mxu0 0
        %2312 = vmatpush1.bf16.msra.mxu0 0
        %2313 = vmatprep.subr.bf16.mxu0 0
        %2314 = vmatpush1.bf16.msra.mxu0 0
        %2315 = vmatprep.subr.bf16.mxu0 0
        %2316 = vmatpush1.bf16.msra.mxu0 0
        %2317 = vmatprep.subr.bf16.mxu0 0
        %2318 = vmatpush1.bf16.msra.mxu0 %v2298
        %2319 = vmatprep.subr.bf16.mxu0 0
        %2320 = vmatpush1.bf16.msra.mxu0 %v2297
        %2321 = vmatprep.subr.bf16.mxu0 0
        %2322 = vmatpush2.bf16.msra.mxu0 0
        %2323 = vmatprep.subr.bf16.mxu0 0
        %2324 = vmatpush2.bf16.msra.mxu0 0
        %2325 = vmatprep.subr.bf16.mxu0 0
        %2326 = vmatpush2.bf16.msra.mxu0 0
        %2327 = vmatprep.subr.bf16.mxu0 0
        %2328 = vmatpush2.bf16.msra.mxu0 0
        %2329 = vmatprep.subr.bf16.mxu0 0
        %2330 = vmatpush2.bf16.msra.mxu0 0
        %2331 = vmatprep.subr.bf16.mxu0 0
        %2332 = vmatpush2.bf16.msra.mxu0 0
        %2333 = vmatprep.subr.bf16.mxu0 0
        %2334 = vmatpush2.bf16.msra.mxu0 0
        %2335 = vmatprep.subr.bf16.mxu0 0
        %2336 = vmatpush2.bf16.msra.mxu0 0
        %2337 = vmatprep.mubr.bf16.mxu0 0
        %2338 = vmatmul.mubr.bf16.gmra.mxu0 %v2303
        %v2339 = vpop.f32.mrf.mxu0
        %v2340 = vadd.f32 %v2287, %v2339
        %v2341 = vpop.f32.mrf.mxu0
        %v2342 = vpop.f32.mrf.mxu0
        %v2343 = vpop.f32.mrf.mxu0
        %2344 = vdwg.mxu0
        %v2345 = vpack.c.bf16 %v2340, %v2340
        %2346 = vst [vmem:[%s217] sm:$0xf] %v2345
        %s2347 = sand.u32 %s137, 1
        %s2348 = scalar_lea.sflag [#allocation3], %s2347
        %s2349 = sand.u32 %s137, 1
        %s2350 = smul.addr %s2349, 4
        %s2351 = scalar_lea.vmem [#allocation2], %s2350
        // Predicated region
        $region41: #{tpu_custom_call.1} parent=39 // pred_check
          %p2352 = pneg %p147
        $region42: #{tpu_custom_call.1} parent=39 // pred_check_branch
          %2354 = sbr.rel (%p2352) target = $region44
        $region43: #{tpu_custom_call.1} parent=39 // pred_region
          %s2356 = ssub.s32 64, 64
          %2357 = vsyncadd %s2348, %s2356
          %s2358 = smul.addr %s19, 64
          %s2359 = scalar_lea.hbm %s5, %s2358
          %s2361 = sshll.u32 %s2351, 4
          %s2362 = int_to_ptr.vmem [resolvable:$true] %s2361
          %2364 = dma.vmem_to_hbm [thread:$0]  %s2362, 64, %s2359, %s2348
        $region44: #{tpu_custom_call.1} parent=39 // pred_fallthru
          _
      $region40: #{tpu_custom_call.1} parent=5 // pred_fallthru
        _
      %p2365 = scmp.le.s32.totalorder 2, %s14
      // Predicated region
      $region45: #{tpu_custom_call.1} parent=5 // pred_check
        %p2366 = pneg %p2365
      $region46: #{tpu_custom_call.1} parent=5 // pred_check_branch
        %2368 = sbr.rel (%p2366) target = $region48
      $region47: #{tpu_custom_call.1} parent=5 // pred_region
        %s2369 = ssub.s32 %s14, 2
        // Predicated region
        $region49: #{tpu_custom_call.1} parent=47 // pred_check
          %p2370 = pneg %p153
        $region50: #{tpu_custom_call.1} parent=47 // pred_check_branch
          %2372 = sbr.rel (%p2370) target = $region52
        $region51: #{tpu_custom_call.1} parent=47 // pred_region
          %s2373 = sand.u32 %s138, 1
          %s2374 = scalar_lea.sflag [#allocation3], %s2373
          %s2375 = sand.u32 %s138, 1
          %s2376 = smul.addr %s2375, 4
          %s2377 = scalar_lea.vmem [#allocation2], %s2376
          %2378 = dma.done %s2374, 64
        $region52: #{tpu_custom_call.1} parent=47 // pred_fallthru
          _
      $region48: #{tpu_custom_call.1} parent=5 // pred_fallthru
        _
    $region6: #{tpu_custom_call.1} parent=1 // loop_footer
      %s18 = sadd.s32 1, %s14
    $region7: #{tpu_custom_call.1} parent=1 // loop_footer_branch
      %13 = sbr.rel target = $region3
    $region8: #{tpu_custom_call.1} parent=1 // loop_exit
      _
    %2379 = vsyncpa [#allocation3], 1
    %s2380 = scalar_lea.sflag [#allocation3], 1
    %2381 = vsyncpa %s2380, 1

</llo_original>
